<compile_context>
chip_gen: v6e
topology: v6e:2x2x1
jax: 0.10.0
libtpu: 0.0.40
codegen_flags: <defaults>
</compile_context>

<pallas_src>
import jax
import jax.numpy as jnp
from jax.experimental import pallas as pl
from jax.experimental.pallas import tpu as pltpu

H1_P = 512    # 500 -> 512
H2_P = 512    # 500 -> 512
H3_P = 128    # 100 -> 128
OUT_P = 128   # n_output -> 128 (lane-dense output slab; sliced in wrapper)


def mlp_kernel(x_ref,
               w1_ref, b1_ref,
               w2_ref, b2_ref,
               w3_ref, b3_ref,
               w4_ref, b4_ref,
               o_ref):
    # Linear(n_feature, 500): bf16 operands into the MXU, f32 accumulation.
    x = x_ref[...]
    h1 = jnp.dot(x, w1_ref[...],
                 preferred_element_type=jnp.float32) + b1_ref[...]
    # Linear(500, 500) + ReLU
    h2 = jnp.dot(h1.astype(jnp.bfloat16), w2_ref[...],
                 preferred_element_type=jnp.float32) + b2_ref[...]
    h2 = jnp.maximum(h2, 0.0)
    # Linear(500, 100)
    h3 = jnp.dot(h2.astype(jnp.bfloat16), w3_ref[...],
                 preferred_element_type=jnp.float32) + b3_ref[...]
    # Dropout(p=0.3): identity in eval mode.
    # TODO(synk): add pltpu.prng_random_bits-based mask if training-mode dropout is needed.
    # Linear(100, n_output) + Sigmoid. Padded output columns give sigmoid(0)=0.5,
    # which is sliced off in the wrapper.
    h4 = jnp.dot(h3.astype(jnp.bfloat16), w4_ref[...],
                 preferred_element_type=jnp.float32) + b4_ref[...]
    o_ref[...] = jax.nn.sigmoid(h4)


def binary_classifier_forward(x, params, n_output):
    (w1, b1, w2, b2, w3, b3, w4, b4) = params
    B, n_feat = x.shape

    # Batch tile: 512 rows for big batches (amortizes the ~0.35us/step grid
    # overhead; intermediates at TB=512 are ~2 MiB f32, far under the 32 MiB
    # scoped-VMEM default and v7x's 64 MiB physical), 256 for medium batches
    # (fills the 256-wide MXU), otherwise just round tiny B up to a sublane
    # multiple of 8 and run a single grid step.
    if B >= 1024:
        TB = 512
    elif B >= 256:
        TB = 256
    else:
        TB = ((B + 7) // 8) * 8
    Bp = pl.cdiv(B, TB) * TB

    xb = x.astype(jnp.bfloat16)
    if Bp != B:
        xb = jnp.pad(xb, ((0, Bp - B), (0, 0)))

    # Weights/biases stay VMEM-resident across batch tiles (constant index_map).
    def resident(a):
        return pl.BlockSpec(a.shape, lambda i: (0,) * a.ndim)

    out_pad = pl.pallas_call(
        mlp_kernel,
        out_shape=jax.ShapeDtypeStruct((Bp, OUT_P), jnp.float32),
        grid=(Bp // TB,),
        in_specs=[pl.BlockSpec((TB, n_feat), lambda i: (i, 0)),
                  resident(w1), resident(b1),
                  resident(w2), resident(b2),
                  resident(w3), resident(b3),
                  resident(w4), resident(b4)],
        out_specs=pl.BlockSpec((TB, OUT_P), lambda i: (i, 0)),
        compiler_params=pltpu.CompilerParams(
            dimension_semantics=("parallel",)),
    )(xb, w1, b1, w2, b2, w3, b3, w4, b4)

    return out_pad[:B, :n_output]


def _pad_to(arr, shape):
    pads = [(0, s - d) for d, s in zip(arr.shape, shape)]
    return jnp.pad(arr, pads)


def init_linear(key, fan_in, fan_out, fan_in_pad, fan_out_pad):
    # Deterministic init mimicking PyTorch's uniform(-1/sqrt(fan_in), 1/sqrt(fan_in)).
    kw, kb = jax.random.split(key)
    bound = 1.0 / jnp.sqrt(jnp.float32(fan_in))
    # Stored as (in, out) == transposed PyTorch weight; zero-padded to lane multiples.
    w = jax.random.uniform(kw, (fan_in, fan_out), jnp.float32, -bound, bound)
    b = jax.random.uniform(kb, (1, fan_out), jnp.float32, -bound, bound)
    w = _pad_to(w, (fan_in_pad, fan_out_pad)).astype(jnp.bfloat16)
    b = _pad_to(b, (1, fan_out_pad))  # biases stay f32 (elementwise math in f32)
    return w, b


def make_params(key, n_feature, n_output):
    k1, k2, k3, k4 = jax.random.split(key, 4)
    w1, b1 = init_linear(k1, n_feature, 500, n_feature, H1_P)
    w2, b2 = init_linear(k2, 500, 500, H1_P, H2_P)
    w3, b3 = init_linear(k3, 500, 100, H2_P, H3_P)
    w4, b4 = init_linear(k4, 100, n_output, H3_P, OUT_P)
    return (w1, b1, w2, b2, w3, b3, w4, b4)


if __name__ == "__main__":
    key = jax.random.PRNGKey(0)
    kx, kp = jax.random.split(key)

    batch = 8
    n_feature = 32
    n_output = 2

    x = jax.random.normal(kx, (batch, n_feature), jnp.float32)
    params = make_params(kp, n_feature, n_output)

    out = binary_classifier_forward(x, params, n_output)
    out = jax.block_until_ready(out)
    assert out.shape == (batch, n_output)
    assert bool(jnp.all((out >= 0.0) & (out <= 1.0)))
    print("KERNEL_OK")
</pallas_src>

<mosaic_0001>
module attributes {stable_mosaic.version = 11 : i64} {
  func.func @mlp_kernel(%arg0: i32, %arg1: memref<8x32xbf16, #tpu.memory_space<vmem>>, %arg2: memref<32x512xbf16, #tpu.memory_space<vmem>>, %arg3: memref<1x512xf32, #tpu.memory_space<vmem>>, %arg4: memref<512x512xbf16, #tpu.memory_space<vmem>>, %arg5: memref<1x512xf32, #tpu.memory_space<vmem>>, %arg6: memref<512x128xbf16, #tpu.memory_space<vmem>>, %arg7: memref<1x128xf32, #tpu.memory_space<vmem>>, %arg8: memref<128x128xbf16, #tpu.memory_space<vmem>>, %arg9: memref<1x128xf32, #tpu.memory_space<vmem>>, %arg10: memref<8x128xf32, #tpu.memory_space<vmem>>) attributes {dimension_semantics = [#tpu.dimension_semantics<parallel>], iteration_bounds = array<i64: 1>, scalar_prefetch = 0 : i64, scratch_operands = 0 : i64, tpu.core_type = #tpu.core_type<tc>, window_params = [{transform_indices = @transform_0, window_bounds = array<i64: 8, 32>}, {pipeline_mode = #tpu.pipeline_mode<synchronous>, transform_indices = @transform_1, window_bounds = array<i64: 32, 512>}, {pipeline_mode = #tpu.pipeline_mode<synchronous>, transform_indices = @transform_2, window_bounds = array<i64: 1, 512>}, {pipeline_mode = #tpu.pipeline_mode<synchronous>, transform_indices = @transform_3, window_bounds = array<i64: 512, 512>}, {pipeline_mode = #tpu.pipeline_mode<synchronous>, transform_indices = @transform_4, window_bounds = array<i64: 1, 512>}, {pipeline_mode = #tpu.pipeline_mode<synchronous>, transform_indices = @transform_5, window_bounds = array<i64: 512, 128>}, {pipeline_mode = #tpu.pipeline_mode<synchronous>, transform_indices = @transform_6, window_bounds = array<i64: 1, 128>}, {pipeline_mode = #tpu.pipeline_mode<synchronous>, transform_indices = @transform_7, window_bounds = array<i64: 128, 128>}, {pipeline_mode = #tpu.pipeline_mode<synchronous>, transform_indices = @transform_8, window_bounds = array<i64: 1, 128>}, {transform_indices = @transform_9, window_bounds = array<i64: 8, 128>}]} {
    %c0 = arith.constant 0 : index
    %c0_0 = arith.constant 0 : index
    %0 = vector.load %arg1[%c0, %c0_0] : memref<8x32xbf16, #tpu.memory_space<vmem>>, vector<8x32xbf16>
    %c0_1 = arith.constant 0 : index
    %c0_2 = arith.constant 0 : index
    %1 = vector.load %arg2[%c0_1, %c0_2] : memref<32x512xbf16, #tpu.memory_space<vmem>>, vector<32x512xbf16>
    %cst = arith.constant dense<0.000000e+00> : vector<8x512xf32>
    %2 = tpu.matmul %0, %1, %cst {dimension_numbers = #tpu.dot_dimension_numbers<[1], [0], [0], [1], [0, 0, 1, 1], [], []>} : vector<8x32xbf16>, vector<32x512xbf16>, vector<8x512xf32> -> vector<8x512xf32>
    %c0_3 = arith.constant 0 : index
    %c0_4 = arith.constant 0 : index
    %3 = vector.load %arg3[%c0_3, %c0_4] : memref<1x512xf32, #tpu.memory_space<vmem>>, vector<1x512xf32>
    %4 = vector.broadcast %3 : vector<1x512xf32> to vector<8x512xf32>
    %5 = arith.addf %2, %4 : vector<8x512xf32>
    %6 = arith.truncf %5 : vector<8x512xf32> to vector<8x512xbf16>
    %c0_5 = arith.constant 0 : index
    %c0_6 = arith.constant 0 : index
    %7 = vector.load %arg4[%c0_5, %c0_6] : memref<512x512xbf16, #tpu.memory_space<vmem>>, vector<512x512xbf16>
    %cst_7 = arith.constant dense<0.000000e+00> : vector<8x512xf32>
    %8 = tpu.matmul %6, %7, %cst_7 {dimension_numbers = #tpu.dot_dimension_numbers<[1], [0], [0], [1], [0, 0, 1, 1], [], []>} : vector<8x512xbf16>, vector<512x512xbf16>, vector<8x512xf32> -> vector<8x512xf32>
    %c0_8 = arith.constant 0 : index
    %c0_9 = arith.constant 0 : index
    %9 = vector.load %arg5[%c0_8, %c0_9] : memref<1x512xf32, #tpu.memory_space<vmem>>, vector<1x512xf32>
    %10 = vector.broadcast %9 : vector<1x512xf32> to vector<8x512xf32>
    %11 = arith.addf %8, %10 : vector<8x512xf32>
    %cst_10 = arith.constant 0.000000e+00 : f32
    %12 = vector.broadcast %cst_10 : f32 to vector<8x512xf32>
    %13 = arith.maximumf %11, %12 : vector<8x512xf32>
    %14 = arith.truncf %13 : vector<8x512xf32> to vector<8x512xbf16>
    %c0_11 = arith.constant 0 : index
    %c0_12 = arith.constant 0 : index
    %15 = vector.load %arg6[%c0_11, %c0_12] : memref<512x128xbf16, #tpu.memory_space<vmem>>, vector<512x128xbf16>
    %cst_13 = arith.constant dense<0.000000e+00> : vector<8x128xf32>
    %16 = tpu.matmul %14, %15, %cst_13 {dimension_numbers = #tpu.dot_dimension_numbers<[1], [0], [0], [1], [0, 0, 1, 1], [], []>} : vector<8x512xbf16>, vector<512x128xbf16>, vector<8x128xf32> -> vector<8x128xf32>
    %c0_14 = arith.constant 0 : index
    %c0_15 = arith.constant 0 : index
    %17 = vector.load %arg7[%c0_14, %c0_15] : memref<1x128xf32, #tpu.memory_space<vmem>>, vector<1x128xf32>
    %18 = vector.broadcast %17 : vector<1x128xf32> to vector<8x128xf32>
    %19 = arith.addf %16, %18 : vector<8x128xf32>
    %20 = arith.truncf %19 : vector<8x128xf32> to vector<8x128xbf16>
    %c0_16 = arith.constant 0 : index
    %c0_17 = arith.constant 0 : index
    %21 = vector.load %arg8[%c0_16, %c0_17] : memref<128x128xbf16, #tpu.memory_space<vmem>>, vector<128x128xbf16>
    %cst_18 = arith.constant dense<0.000000e+00> : vector<8x128xf32>
    %22 = tpu.matmul %20, %21, %cst_18 {dimension_numbers = #tpu.dot_dimension_numbers<[1], [0], [0], [1], [0, 0, 1, 1], [], []>} : vector<8x128xbf16>, vector<128x128xbf16>, vector<8x128xf32> -> vector<8x128xf32>
    %c0_19 = arith.constant 0 : index
    %c0_20 = arith.constant 0 : index
    %23 = vector.load %arg9[%c0_19, %c0_20] : memref<1x128xf32, #tpu.memory_space<vmem>>, vector<1x128xf32>
    %24 = vector.broadcast %23 : vector<1x128xf32> to vector<8x128xf32>
    %25 = arith.addf %22, %24 : vector<8x128xf32>
    %26 = arith.negf %25 : vector<8x128xf32>
    %27 = math.exp %26 : vector<8x128xf32>
    %cst_21 = arith.constant 1.000000e+00 : f32
    %28 = vector.broadcast %cst_21 : f32 to vector<8x128xf32>
    %29 = arith.addf %28, %27 : vector<8x128xf32>
    %30 = arith.divf %28, %29 : vector<8x128xf32>
    %c0_22 = arith.constant 0 : index
    %c0_23 = arith.constant 0 : index
    %31 = vector.load %arg10[%c0_22, %c0_23] : memref<8x128xf32, #tpu.memory_space<vmem>>, vector<8x128xf32>
    tpu.vector_store %arg10[%c0_22, %c0_23], %30 {strides = array<i32>} : memref<8x128xf32, #tpu.memory_space<vmem>>, vector<8x128xf32>,
    return
  }
  func.func @transform_0(%arg0: i32) -> (i32, i32) {
    %c0_i32 = arith.constant 0 : i32
    %c0_i32_0 = arith.constant 0 : i32
    return %arg0, %c0_i32 : i32, i32
  }
  func.func @transform_1(%arg0: i32) -> (i32, i32) {
    %c0_i32 = arith.constant 0 : i32
    %c0_i32_0 = arith.constant 0 : i32
    %c0_i32_1 = arith.constant 0 : i32
    return %c0_i32, %c0_i32_0 : i32, i32
  }
  func.func @transform_2(%arg0: i32) -> (i32, i32) {
    %c0_i32 = arith.constant 0 : i32
    %c0_i32_0 = arith.constant 0 : i32
    %c0_i32_1 = arith.constant 0 : i32
    return %c0_i32, %c0_i32_0 : i32, i32
  }
  func.func @transform_3(%arg0: i32) -> (i32, i32) {
    %c0_i32 = arith.constant 0 : i32
    %c0_i32_0 = arith.constant 0 : i32
    %c0_i32_1 = arith.constant 0 : i32
    return %c0_i32, %c0_i32_0 : i32, i32
  }
  func.func @transform_4(%arg0: i32) -> (i32, i32) {
    %c0_i32 = arith.constant 0 : i32
    %c0_i32_0 = arith.constant 0 : i32
    %c0_i32_1 = arith.constant 0 : i32
    return %c0_i32, %c0_i32_0 : i32, i32
  }
  func.func @transform_5(%arg0: i32) -> (i32, i32) {
    %c0_i32 = arith.constant 0 : i32
    %c0_i32_0 = arith.constant 0 : i32
    %c0_i32_1 = arith.constant 0 : i32
    return %c0_i32, %c0_i32_0 : i32, i32
  }
  func.func @transform_6(%arg0: i32) -> (i32, i32) {
    %c0_i32 = arith.constant 0 : i32
    %c0_i32_0 = arith.constant 0 : i32
    %c0_i32_1 = arith.constant 0 : i32
    return %c0_i32, %c0_i32_0 : i32, i32
  }
  func.func @transform_7(%arg0: i32) -> (i32, i32) {
    %c0_i32 = arith.constant 0 : i32
    %c0_i32_0 = arith.constant 0 : i32
    %c0_i32_1 = arith.constant 0 : i32
    return %c0_i32, %c0_i32_0 : i32, i32
  }
  func.func @transform_8(%arg0: i32) -> (i32, i32) {
    %c0_i32 = arith.constant 0 : i32
    %c0_i32_0 = arith.constant 0 : i32
    %c0_i32_1 = arith.constant 0 : i32
    return %c0_i32, %c0_i32_0 : i32, i32
  }
  func.func @transform_9(%arg0: i32) -> (i32, i32) {
    %c0_i32 = arith.constant 0 : i32
    %c0_i32_0 = arith.constant 0 : i32
    return %arg0, %c0_i32 : i32, i32
  }
}

</mosaic_0001>

<llo_original>
// kernel: tpu_custom_call.1
$region0: #{tpu_custom_call.1}
  #allocation0 [shape = 'u32[]', space=smem, size = 0x4, offset = 0x4, fixed_abs, tag = 'smem constant byte address 0x4 - core index']
  #allocation1 [shape = 'u32[144,128]{1,0:T(1,128)}', space=vmem, size = 0x12000, scoped, tag = 'internal scratch']
  %s0 = inlined_call_operand.hbm [shape: bf16[8,32], index: 0, kind: input, shape index: {}]
  %s1 = inlined_call_operand.hbm [shape: bf16[32,512], index: 1, kind: input, shape index: {}]
  %s2 = inlined_call_operand.hbm [shape: f32[1,512], index: 2, kind: input, shape index: {}]
  %s3 = inlined_call_operand.hbm [shape: bf16[512,512], index: 3, kind: input, shape index: {}]
  %s4 = inlined_call_operand.vmem [shape: f32[1,512], index: 4, kind: input, shape index: {}]
  %s5 = inlined_call_operand.hbm [shape: bf16[512,128], index: 5, kind: input, shape index: {}]
  %s6 = inlined_call_operand.vmem [shape: f32[1,128], index: 6, kind: input, shape index: {}]
  %s7 = inlined_call_operand.hbm [shape: bf16[128,128], index: 7, kind: input, shape index: {}]
  %s8 = inlined_call_operand.vmem [shape: f32[1,128], index: 8, kind: input, shape index: {}]
  %s9 = inlined_call_operand.hbm [shape: f32[8,128], index: 9, kind: output, shape index: {}]
  %s10 = sld [smem:[#allocation0]]
  $region70: #{tpu_custom_call.1} parent=0
    _
  %s12 = ssub.s32 1, %s10
  %s13 = scalar_select 0, %s12, %s10
  $region1: #{tpu_custom_call.1} parent=0
    #allocation2 [shape = 'u8[2048]{0}', space=vmem, size = 0x800, scoped, tag = 'input window, operand 0, single buffered']
    #allocation3 [shape = 's32[1]{0}', space=sflag, size = 0x4, scoped, tag = 'scoped memory for tpu_custom_call.1']
    #allocation4 [shape = 's32[1]{0}', space=sflag, size = 0x4, scoped, tag = 'scoped memory for tpu_custom_call.1']
    #allocation5 [shape = 'u8[32768]{0}', space=vmem, size = 0x8000, scoped, tag = 'input window, operand 1, single buffered']
    #allocation6 [shape = 's32[1]{0}', space=sflag, size = 0x4, scoped, tag = 'scoped memory for tpu_custom_call.1']
    #allocation7 [shape = 'u8[2048]{0}', space=vmem, size = 0x800, scoped, tag = 'input window, operand 2, single buffered']
    #allocation8 [shape = 'u8[524288]{0}', space=vmem, size = 0x80000, scoped, tag = 'input window, operand 3, single buffered']
    #allocation9 [shape = 's32[1]{0}', space=sflag, size = 0x4, scoped, tag = 'scoped memory for tpu_custom_call.1']
    #allocation10 [shape = 'u8[131072]{0}', space=vmem, size = 0x20000, scoped, tag = 'input window, operand 5, single buffered']
    #allocation11 [shape = 'u8[32768]{0}', space=vmem, size = 0x8000, scoped, tag = 'input window, operand 7, single buffered']
    #allocation12 [shape = 's32[1]{0}', space=sflag, size = 0x4, scoped, tag = 'scoped memory for tpu_custom_call.1']
    #allocation13 [shape = 'u8[4096]{0}', space=vmem, size = 0x1000, scoped, tag = 'output window, operand 0, single buffered']
    %14 = vsyncpa [#allocation3], 0
    %15 = vsyncpa [#allocation6], 0
    %16 = vsyncpa [#allocation9], 0
    %17 = vsyncpa [#allocation12], 0
    %18 = vsyncpa [#allocation4], 0
    // Predicated region
    $region2: #{tpu_custom_call.1} parent=1 // pred_check
      _
    $region3: #{tpu_custom_call.1} parent=1 // pred_check_branch
      %20 = sbr.rel (0) target = $region5
    $region4: #{tpu_custom_call.1} parent=1 // pred_region
      %s22 = ssub.s32 64, 64
      %23 = vsyncadd [#allocation3], %s22
      %s25 = sshll.u32 [#allocation2], 4
      %s26 = int_to_ptr.vmem [resolvable:$true] %s25
      %28 = dma.hbm_to_vmem [thread:$0]  %s0, 64, %s26, [#allocation3]
    $region5: #{tpu_custom_call.1} parent=1 // pred_fallthru
      _
    // Predicated region
    $region6: #{tpu_custom_call.1} parent=1 // pred_check
      _
    $region7: #{tpu_custom_call.1} parent=1 // pred_check_branch
      %30 = sbr.rel (0) target = $region9
    $region8: #{tpu_custom_call.1} parent=1 // pred_region
      %s32 = ssub.s32 1024, 1024
      %33 = vsyncadd [#allocation6], %s32
      %s34 = sshll.u32 [#allocation5], 4
      %s35 = int_to_ptr.vmem [resolvable:$true] %s34
      %40 = dma.hbm_to_vmem [thread:$0]  %s1, 1024, %s35, [#allocation6], 256, 256, 16
    $region9: #{tpu_custom_call.1} parent=1 // pred_fallthru
      _
    // Predicated region
    $region10: #{tpu_custom_call.1} parent=1 // pred_check
      _
    $region11: #{tpu_custom_call.1} parent=1 // pred_check_branch
      %42 = sbr.rel (0) target = $region13
    $region12: #{tpu_custom_call.1} parent=1 // pred_region
      %s44 = ssub.s32 64, 64
      %45 = vsyncadd [#allocation6], %s44
      %s47 = sshll.u32 [#allocation7], 4
      %s48 = int_to_ptr.vmem [resolvable:$true] %s47
      %50 = dma.hbm_to_vmem [thread:$0]  %s2, 64, %s48, [#allocation6]
    $region13: #{tpu_custom_call.1} parent=1 // pred_fallthru
      _
    // Predicated region
    $region14: #{tpu_custom_call.1} parent=1 // pred_check
      _
    $region15: #{tpu_custom_call.1} parent=1 // pred_check_branch
      %52 = sbr.rel (0) target = $region17
    $region16: #{tpu_custom_call.1} parent=1 // pred_region
      %s54 = ssub.s32 16384, 16384
      %55 = vsyncadd [#allocation9], %s54
      %s56 = sshll.u32 [#allocation8], 4
      %s57 = int_to_ptr.vmem [resolvable:$true] %s56
      %62 = dma.hbm_to_vmem [thread:$0]  %s3, 16384, %s57, [#allocation9], 256, 256, 16
    $region17: #{tpu_custom_call.1} parent=1 // pred_fallthru
      _
    // Predicated region
    $region18: #{tpu_custom_call.1} parent=1 // pred_check
      _
    $region19: #{tpu_custom_call.1} parent=1 // pred_check_branch
      %64 = sbr.rel (0) target = $region21
    $region20: #{tpu_custom_call.1} parent=1 // pred_region
      _
    $region21: #{tpu_custom_call.1} parent=1 // pred_fallthru
      _
    // Predicated region
    $region22: #{tpu_custom_call.1} parent=1 // pred_check
      _
    $region23: #{tpu_custom_call.1} parent=1 // pred_check_branch
      %66 = sbr.rel (0) target = $region25
    $region24: #{tpu_custom_call.1} parent=1 // pred_region
      %s68 = ssub.s32 4096, 4096
      %69 = vsyncadd [#allocation9], %s68
      %s70 = sshll.u32 [#allocation10], 4
      %s71 = int_to_ptr.vmem [resolvable:$true] %s70
      %76 = dma.hbm_to_vmem [thread:$0]  %s5, 4096, %s71, [#allocation9], 64, 64, 4
    $region25: #{tpu_custom_call.1} parent=1 // pred_fallthru
      _
    // Predicated region
    $region26: #{tpu_custom_call.1} parent=1 // pred_check
      _
    $region27: #{tpu_custom_call.1} parent=1 // pred_check_branch
      %78 = sbr.rel (0) target = $region29
    $region28: #{tpu_custom_call.1} parent=1 // pred_region
      _
    $region29: #{tpu_custom_call.1} parent=1 // pred_fallthru
      _
    // Predicated region
    $region30: #{tpu_custom_call.1} parent=1 // pred_check
      _
    $region31: #{tpu_custom_call.1} parent=1 // pred_check_branch
      %80 = sbr.rel (0) target = $region33
    $region32: #{tpu_custom_call.1} parent=1 // pred_region
      %s82 = ssub.s32 1024, 1024
      %83 = vsyncadd [#allocation12], %s82
      %s84 = sshll.u32 [#allocation11], 4
      %s85 = int_to_ptr.vmem [resolvable:$true] %s84
      %90 = dma.hbm_to_vmem [thread:$0]  %s7, 1024, %s85, [#allocation12], 64, 64, 4
    $region33: #{tpu_custom_call.1} parent=1 // pred_fallthru
      _
    // Predicated region
    $region34: #{tpu_custom_call.1} parent=1 // pred_check
      _
    $region35: #{tpu_custom_call.1} parent=1 // pred_check_branch
      %92 = sbr.rel (0) target = $region37
    $region36: #{tpu_custom_call.1} parent=1 // pred_region
      _
    $region37: #{tpu_custom_call.1} parent=1 // pred_fallthru
      _
    // Predicated region
    $region38: #{tpu_custom_call.1} parent=1 // pred_check
      _
    $region39: #{tpu_custom_call.1} parent=1 // pred_check_branch
      %94 = sbr.rel (0) target = $region41
    $region40: #{tpu_custom_call.1} parent=1 // pred_region
      %95 = dma.done [#allocation3], 64
    $region41: #{tpu_custom_call.1} parent=1 // pred_fallthru
      _
    // Predicated region
    $region42: #{tpu_custom_call.1} parent=1 // pred_check
      _
    $region43: #{tpu_custom_call.1} parent=1 // pred_check_branch
      %97 = sbr.rel (0) target = $region45
    $region44: #{tpu_custom_call.1} parent=1 // pred_region
      %98 = dma.done [#allocation6], 1024
    $region45: #{tpu_custom_call.1} parent=1 // pred_fallthru
      _
    // Predicated region
    $region46: #{tpu_custom_call.1} parent=1 // pred_check
      _
    $region47: #{tpu_custom_call.1} parent=1 // pred_check_branch
      %100 = sbr.rel (0) target = $region49
    $region48: #{tpu_custom_call.1} parent=1 // pred_region
      %101 = dma.done [#allocation6], 64
    $region49: #{tpu_custom_call.1} parent=1 // pred_fallthru
      _
    // Predicated region
    $region50: #{tpu_custom_call.1} parent=1 // pred_check
      _
    $region51: #{tpu_custom_call.1} parent=1 // pred_check_branch
      %103 = sbr.rel (0) target = $region53
    $region52: #{tpu_custom_call.1} parent=1 // pred_region
      %104 = dma.done [#allocation9], 16384
    $region53: #{tpu_custom_call.1} parent=1 // pred_fallthru
      _
    // Predicated region
    $region54: #{tpu_custom_call.1} parent=1 // pred_check
      _
    $region55: #{tpu_custom_call.1} parent=1 // pred_check_branch
      %106 = sbr.rel (0) target = $region57
    $region56: #{tpu_custom_call.1} parent=1 // pred_region
      %107 = dma.done [#allocation9], 4096
    $region57: #{tpu_custom_call.1} parent=1 // pred_fallthru
      _
    // Predicated region
    $region58: #{tpu_custom_call.1} parent=1 // pred_check
      _
    $region59: #{tpu_custom_call.1} parent=1 // pred_check_branch
      %109 = sbr.rel (0) target = $region61
    $region60: #{tpu_custom_call.1} parent=1 // pred_region
      %110 = dma.done [#allocation12], 1024
    $region61: #{tpu_custom_call.1} parent=1 // pred_fallthru
      _
    %v112 = vld [vmem:[#allocation2] sm:$0xf]
    %v113 = vld [vmem:[#allocation5] sm:$0xff]
    %v114 = vld [vmem:[#allocation5 + $0x8] sm:$0xff]
    %v115 = vld [vmem:[#allocation5 + $0x10] sm:$0xff]
    %v116 = vld [vmem:[#allocation5 + $0x18] sm:$0xff]
    %v117 = vld [vmem:[#allocation5 + $0x20] sm:$0xff]
    %v118 = vld [vmem:[#allocation5 + $0x28] sm:$0xff]
    %v119 = vld [vmem:[#allocation5 + $0x30] sm:$0xff]
    %v120 = vld [vmem:[#allocation5 + $0x38] sm:$0xff]
    %v121 = vld [vmem:[#allocation7] sm:$0xf]
    %v123 = vlaneseq
    %v124 = vshrl.u32 %v123, 7
    %v125 = vsub.s32 0, %v124
    %v126 = vrot.slane %v121, %v125
    %v127 = vlaneseq
    %v128 = vshrl.u32 %v127, 7
    %v129 = vsub.s32 1, %v128
    %v130 = vrot.slane %v121, %v129
    %v131 = vlaneseq
    %v132 = vshrl.u32 %v131, 7
    %v133 = vsub.s32 2, %v132
    %v134 = vrot.slane %v121, %v133
    %v135 = vlaneseq
    %v136 = vshrl.u32 %v135, 7
    %v137 = vsub.s32 3, %v136
    %v138 = vrot.slane %v121, %v137
    %v151 = vunpack.c.l.b16 %v113
    %v152 = vunpack.c.h.b16 %v113
    %v153 = vunpack.c.l.b16 %v114
    %v154 = vunpack.c.h.b16 %v114
    %v155 = vunpack.c.l.b16 %v115
    %v156 = vunpack.c.h.b16 %v115
    %v157 = vunpack.c.l.b16 %v116
    %v158 = vunpack.c.h.b16 %v116
    %v159 = vunpack.c.l.b16 %v117
    %v160 = vunpack.c.h.b16 %v117
    %v161 = vunpack.c.l.b16 %v118
    %v162 = vunpack.c.h.b16 %v118
    %v163 = vunpack.c.l.b16 %v119
    %v164 = vunpack.c.h.b16 %v119
    %v165 = vunpack.c.l.b16 %v120
    %v166 = vunpack.c.h.b16 %v120
    %v167 = vpack.c.b16 %v155, %v151
    %v168 = vpack.c.b16 %v156, %v152
    %v169 = vpack.c.b16 %v157, %v153
    %v170 = vpack.c.b16 %v158, %v154
    %v171 = vpack.c.b16 %v163, %v159
    %v172 = vpack.c.b16 %v164, %v160
    %v173 = vpack.c.b16 %v165, %v161
    %v174 = vpack.c.b16 %v166, %v162
    %vm183 = vcmask 261120
    %v185 = vsel %vm183, %v112, 0
    %187 = vmatprep.subr.bf16.mxu0 0
    %188 = vmatpush1.bf16.msra.mxu0 0
    %189 = vmatprep.subr.bf16.mxu0 0
    %190 = vmatpush1.bf16.msra.mxu0 0
    %191 = vmatprep.subr.bf16.mxu0 0
    %192 = vmatpush1.bf16.msra.mxu0 0
    %193 = vmatprep.subr.bf16.mxu0 0
    %194 = vmatpush1.bf16.msra.mxu0 0
    %195 = vmatprep.subr.bf16.mxu0 0
    %196 = vmatpush1.bf16.msra.mxu0 0
    %197 = vmatprep.subr.bf16.mxu0 0
    %198 = vmatpush1.bf16.msra.mxu0 0
    %199 = vmatprep.subr.bf16.mxu0 %v172
    %200 = vmatpush1.bf16.msra.mxu0 %v171
    %201 = vmatprep.subr.bf16.mxu0 %v168
    %202 = vmatpush1.bf16.msra.mxu0 %v167
    %203 = vmatprep.subr.bf16.mxu0 0
    %204 = vmatpush2.bf16.msra.mxu0 0
    %205 = vmatprep.subr.bf16.mxu0 0
    %206 = vmatpush2.bf16.msra.mxu0 0
    %207 = vmatprep.subr.bf16.mxu0 0
    %208 = vmatpush2.bf16.msra.mxu0 0
    %209 = vmatprep.subr.bf16.mxu0 0
    %210 = vmatpush2.bf16.msra.mxu0 0
    %211 = vmatprep.subr.bf16.mxu0 0
    %212 = vmatpush2.bf16.msra.mxu0 0
    %213 = vmatprep.subr.bf16.mxu0 0
    %214 = vmatpush2.bf16.msra.mxu0 0
    %215 = vmatprep.subr.bf16.mxu0 0
    %216 = vmatpush2.bf16.msra.mxu0 0
    %217 = vmatprep.subr.bf16.mxu0 0
    %218 = vmatpush2.bf16.msra.mxu0 0
    %219 = vmatprep.mubr.bf16.mxu0 0
    %220 = vmatmul.mubr.bf16.gmra.mxu0 %v185
    %v221 = vpop.f32.mrf.mxu0
    %v222 = vadd.f32 %v126, %v221
    %v223 = vpop.f32.mrf.mxu0
    %v224 = vadd.f32 %v130, %v223
    %v225 = vpop.f32.mrf.mxu0
    %v226 = vpop.f32.mrf.mxu0
    %227 = vdwg.mxu0
    %228 = vmatprep.subr.bf16.mxu0 0
    %229 = vmatpush1.bf16.msra.mxu0 0
    %230 = vmatprep.subr.bf16.mxu0 0
    %231 = vmatpush1.bf16.msra.mxu0 0
    %232 = vmatprep.subr.bf16.mxu0 0
    %233 = vmatpush1.bf16.msra.mxu0 0
    %234 = vmatprep.subr.bf16.mxu0 0
    %235 = vmatpush1.bf16.msra.mxu0 0
    %236 = vmatprep.subr.bf16.mxu0 0
    %237 = vmatpush1.bf16.msra.mxu0 0
    %238 = vmatprep.subr.bf16.mxu0 0
    %239 = vmatpush1.bf16.msra.mxu0 0
    %240 = vmatprep.subr.bf16.mxu0 %v174
    %241 = vmatpush1.bf16.msra.mxu0 %v173
    %242 = vmatprep.subr.bf16.mxu0 %v170
    %243 = vmatpush1.bf16.msra.mxu0 %v169
    %244 = vmatprep.subr.bf16.mxu0 0
    %245 = vmatpush2.bf16.msra.mxu0 0
    %246 = vmatprep.subr.bf16.mxu0 0
    %247 = vmatpush2.bf16.msra.mxu0 0
    %248 = vmatprep.subr.bf16.mxu0 0
    %249 = vmatpush2.bf16.msra.mxu0 0
    %250 = vmatprep.subr.bf16.mxu0 0
    %251 = vmatpush2.bf16.msra.mxu0 0
    %252 = vmatprep.subr.bf16.mxu0 0
    %253 = vmatpush2.bf16.msra.mxu0 0
    %254 = vmatprep.subr.bf16.mxu0 0
    %255 = vmatpush2.bf16.msra.mxu0 0
    %256 = vmatprep.subr.bf16.mxu0 0
    %257 = vmatpush2.bf16.msra.mxu0 0
    %258 = vmatprep.subr.bf16.mxu0 0
    %259 = vmatpush2.bf16.msra.mxu0 0
    %260 = vmatprep.mubr.bf16.mxu0 0
    %261 = vmatmul.mubr.bf16.gmra.mxu0 %v185
    %v262 = vpop.f32.mrf.mxu0
    %v263 = vadd.f32 %v134, %v262
    %v264 = vpop.f32.mrf.mxu0
    %v265 = vadd.f32 %v138, %v264
    %v266 = vpop.f32.mrf.mxu0
    %v267 = vpop.f32.mrf.mxu0
    %268 = vdwg.mxu0
    %v269 = vpack.c.bf16 %v222, %v222
    %v270 = vpack.c.bf16 %v224, %v224
    %v271 = vpack.c.bf16 %v263, %v263
    %v272 = vpack.c.bf16 %v265, %v265
    %v273 = vld [vmem:[#allocation8] sm:$0xff]
    %v274 = vld [vmem:[#allocation8 + $0x8] sm:$0xff]
    %v275 = vld [vmem:[#allocation8 + $0x10] sm:$0xff]
    %v276 = vld [vmem:[#allocation8 + $0x18] sm:$0xff]
    %v277 = vld [vmem:[#allocation8 + $0x20] sm:$0xff]
    %v278 = vld [vmem:[#allocation8 + $0x28] sm:$0xff]
    %v279 = vld [vmem:[#allocation8 + $0x30] sm:$0xff]
    %v280 = vld [vmem:[#allocation8 + $0x38] sm:$0xff]
    %v281 = vld [vmem:[#allocation8 + $0x40] sm:$0xff]
    %v282 = vld [vmem:[#allocation8 + $0x48] sm:$0xff]
    %v283 = vld [vmem:[#allocation8 + $0x50] sm:$0xff]
    %v284 = vld [vmem:[#allocation8 + $0x58] sm:$0xff]
    %v285 = vld [vmem:[#allocation8 + $0x60] sm:$0xff]
    %v286 = vld [vmem:[#allocation8 + $0x68] sm:$0xff]
    %v287 = vld [vmem:[#allocation8 + $0x70] sm:$0xff]
    %v288 = vld [vmem:[#allocation8 + $0x78] sm:$0xff]
    %v289 = vld [vmem:[#allocation8 + $0x80] sm:$0xff]
    %v290 = vld [vmem:[#allocation8 + $0x88] sm:$0xff]
    %v291 = vld [vmem:[#allocation8 + $0x90] sm:$0xff]
    %v292 = vld [vmem:[#allocation8 + $0x98] sm:$0xff]
    %v293 = vld [vmem:[#allocation8 + $0xa0] sm:$0xff]
    %v294 = vld [vmem:[#allocation8 + $0xa8] sm:$0xff]
    %v295 = vld [vmem:[#allocation8 + $0xb0] sm:$0xff]
    %v296 = vld [vmem:[#allocation8 + $0xb8] sm:$0xff]
    %v297 = vld [vmem:[#allocation8 + $0xc0] sm:$0xff]
    %v298 = vld [vmem:[#allocation8 + $0xc8] sm:$0xff]
    %v299 = vld [vmem:[#allocation8 + $0xd0] sm:$0xff]
    %v300 = vld [vmem:[#allocation8 + $0xd8] sm:$0xff]
    %v301 = vld [vmem:[#allocation8 + $0xe0] sm:$0xff]
    %v302 = vld [vmem:[#allocation8 + $0xe8] sm:$0xff]
    %v303 = vld [vmem:[#allocation8 + $0xf0] sm:$0xff]
    %v304 = vld [vmem:[#allocation8 + $0xf8] sm:$0xff]
    %v305 = vld [vmem:[#allocation8 + $0x100] sm:$0xff]
    %v306 = vld [vmem:[#allocation8 + $0x108] sm:$0xff]
    %v307 = vld [vmem:[#allocation8 + $0x110] sm:$0xff]
    %v308 = vld [vmem:[#allocation8 + $0x118] sm:$0xff]
    %v309 = vld [vmem:[#allocation8 + $0x120] sm:$0xff]
    %v310 = vld [vmem:[#allocation8 + $0x128] sm:$0xff]
    %v311 = vld [vmem:[#allocation8 + $0x130] sm:$0xff]
    %v312 = vld [vmem:[#allocation8 + $0x138] sm:$0xff]
    %v313 = vld [vmem:[#allocation8 + $0x140] sm:$0xff]
    %v314 = vld [vmem:[#allocation8 + $0x148] sm:$0xff]
    %v315 = vld [vmem:[#allocation8 + $0x150] sm:$0xff]
    %v316 = vld [vmem:[#allocation8 + $0x158] sm:$0xff]
    %v317 = vld [vmem:[#allocation8 + $0x160] sm:$0xff]
    %v318 = vld [vmem:[#allocation8 + $0x168] sm:$0xff]
    %v319 = vld [vmem:[#allocation8 + $0x170] sm:$0xff]
    %v320 = vld [vmem:[#allocation8 + $0x178] sm:$0xff]
    %v321 = vld [vmem:[#allocation8 + $0x180] sm:$0xff]
    %v322 = vld [vmem:[#allocation8 + $0x188] sm:$0xff]
    %v323 = vld [vmem:[#allocation8 + $0x190] sm:$0xff]
    %v324 = vld [vmem:[#allocation8 + $0x198] sm:$0xff]
    %v325 = vld [vmem:[#allocation8 + $0x1a0] sm:$0xff]
    %v326 = vld [vmem:[#allocation8 + $0x1a8] sm:$0xff]
    %v327 = vld [vmem:[#allocation8 + $0x1b0] sm:$0xff]
    %v328 = vld [vmem:[#allocation8 + $0x1b8] sm:$0xff]
    %v329 = vld [vmem:[#allocation8 + $0x1c0] sm:$0xff]
    %v330 = vld [vmem:[#allocation8 + $0x1c8] sm:$0xff]
    %v331 = vld [vmem:[#allocation8 + $0x1d0] sm:$0xff]
    %v332 = vld [vmem:[#allocation8 + $0x1d8] sm:$0xff]
    %v333 = vld [vmem:[#allocation8 + $0x1e0] sm:$0xff]
    %v334 = vld [vmem:[#allocation8 + $0x1e8] sm:$0xff]
    %v335 = vld [vmem:[#allocation8 + $0x1f0] sm:$0xff]
    %v336 = vld [vmem:[#allocation8 + $0x1f8] sm:$0xff]
    %v337 = vld [vmem:[#allocation8 + $0x200] sm:$0xff]
    %v338 = vld [vmem:[#allocation8 + $0x208] sm:$0xff]
    %v339 = vld [vmem:[#allocation8 + $0x210] sm:$0xff]
    %v340 = vld [vmem:[#allocation8 + $0x218] sm:$0xff]
    %v341 = vld [vmem:[#allocation8 + $0x220] sm:$0xff]
    %v342 = vld [vmem:[#allocation8 + $0x228] sm:$0xff]
    %v343 = vld [vmem:[#allocation8 + $0x230] sm:$0xff]
    %v344 = vld [vmem:[#allocation8 + $0x238] sm:$0xff]
    %v345 = vld [vmem:[#allocation8 + $0x240] sm:$0xff]
    %v346 = vld [vmem:[#allocation8 + $0x248] sm:$0xff]
    %v347 = vld [vmem:[#allocation8 + $0x250] sm:$0xff]
    %v348 = vld [vmem:[#allocation8 + $0x258] sm:$0xff]
    %v349 = vld [vmem:[#allocation8 + $0x260] sm:$0xff]
    %v350 = vld [vmem:[#allocation8 + $0x268] sm:$0xff]
    %v351 = vld [vmem:[#allocation8 + $0x270] sm:$0xff]
    %v352 = vld [vmem:[#allocation8 + $0x278] sm:$0xff]
    %v353 = vld [vmem:[#allocation8 + $0x280] sm:$0xff]
    %v354 = vld [vmem:[#allocation8 + $0x288] sm:$0xff]
    %v355 = vld [vmem:[#allocation8 + $0x290] sm:$0xff]
    %v356 = vld [vmem:[#allocation8 + $0x298] sm:$0xff]
    %v357 = vld [vmem:[#allocation8 + $0x2a0] sm:$0xff]
    %v358 = vld [vmem:[#allocation8 + $0x2a8] sm:$0xff]
    %v359 = vld [vmem:[#allocation8 + $0x2b0] sm:$0xff]
    %v360 = vld [vmem:[#allocation8 + $0x2b8] sm:$0xff]
    %v361 = vld [vmem:[#allocation8 + $0x2c0] sm:$0xff]
    %v362 = vld [vmem:[#allocation8 + $0x2c8] sm:$0xff]
    %v363 = vld [vmem:[#allocation8 + $0x2d0] sm:$0xff]
    %v364 = vld [vmem:[#allocation8 + $0x2d8] sm:$0xff]
    %v365 = vld [vmem:[#allocation8 + $0x2e0] sm:$0xff]
    %v366 = vld [vmem:[#allocation8 + $0x2e8] sm:$0xff]
    %v367 = vld [vmem:[#allocation8 + $0x2f0] sm:$0xff]
    %v368 = vld [vmem:[#allocation8 + $0x2f8] sm:$0xff]
    %v369 = vld [vmem:[#allocation8 + $0x300] sm:$0xff]
    %v370 = vld [vmem:[#allocation8 + $0x308] sm:$0xff]
    %v371 = vld [vmem:[#allocation8 + $0x310] sm:$0xff]
    %v372 = vld [vmem:[#allocation8 + $0x318] sm:$0xff]
    %v373 = vld [vmem:[#allocation8 + $0x320] sm:$0xff]
    %v374 = vld [vmem:[#allocation8 + $0x328] sm:$0xff]
    %v375 = vld [vmem:[#allocation8 + $0x330] sm:$0xff]
    %v376 = vld [vmem:[#allocation8 + $0x338] sm:$0xff]
    %v377 = vld [vmem:[#allocation8 + $0x340] sm:$0xff]
    %v378 = vld [vmem:[#allocation8 + $0x348] sm:$0xff]
    %v379 = vld [vmem:[#allocation8 + $0x350] sm:$0xff]
    %v380 = vld [vmem:[#allocation8 + $0x358] sm:$0xff]
    %v381 = vld [vmem:[#allocation8 + $0x360] sm:$0xff]
    %v382 = vld [vmem:[#allocation8 + $0x368] sm:$0xff]
    %v383 = vld [vmem:[#allocation8 + $0x370] sm:$0xff]
    %v384 = vld [vmem:[#allocation8 + $0x378] sm:$0xff]
    %v385 = vld [vmem:[#allocation8 + $0x380] sm:$0xff]
    %v386 = vld [vmem:[#allocation8 + $0x388] sm:$0xff]
    %v387 = vld [vmem:[#allocation8 + $0x390] sm:$0xff]
    %v388 = vld [vmem:[#allocation8 + $0x398] sm:$0xff]
    %v389 = vld [vmem:[#allocation8 + $0x3a0] sm:$0xff]
    %v390 = vld [vmem:[#allocation8 + $0x3a8] sm:$0xff]
    %v391 = vld [vmem:[#allocation8 + $0x3b0] sm:$0xff]
    %v392 = vld [vmem:[#allocation8 + $0x3b8] sm:$0xff]
    %v393 = vld [vmem:[#allocation8 + $0x3c0] sm:$0xff]
    %v394 = vld [vmem:[#allocation8 + $0x3c8] sm:$0xff]
    %v395 = vld [vmem:[#allocation8 + $0x3d0] sm:$0xff]
    %v396 = vld [vmem:[#allocation8 + $0x3d8] sm:$0xff]
    %v397 = vld [vmem:[#allocation8 + $0x3e0] sm:$0xff]
    %v398 = vld [vmem:[#allocation8 + $0x3e8] sm:$0xff]
    %v399 = vld [vmem:[#allocation8 + $0x3f0] sm:$0xff]
    %v400 = vld [vmem:[#allocation8 + $0x3f8] sm:$0xff]
    %v401 = vld [vmem:[%s4] sm:$0xf]
    %v403 = vlaneseq
    %v404 = vshrl.u32 %v403, 7
    %v405 = vsub.s32 0, %v404
    %v406 = vrot.slane %v401, %v405
    %v407 = vlaneseq
    %v408 = vshrl.u32 %v407, 7
    %v409 = vsub.s32 1, %v408
    %v410 = vrot.slane %v401, %v409
    %v411 = vlaneseq
    %v412 = vshrl.u32 %v411, 7
    %v413 = vsub.s32 2, %v412
    %v414 = vrot.slane %v401, %v413
    %v415 = vlaneseq
    %v416 = vshrl.u32 %v415, 7
    %v417 = vsub.s32 3, %v416
    %v418 = vrot.slane %v401, %v417
    %v551 = vunpack.c.l.b16 %v273
    %v552 = vunpack.c.h.b16 %v273
    %v553 = vunpack.c.l.b16 %v274
    %v554 = vunpack.c.h.b16 %v274
    %v555 = vunpack.c.l.b16 %v275
    %v556 = vunpack.c.h.b16 %v275
    %v557 = vunpack.c.l.b16 %v276
    %v558 = vunpack.c.h.b16 %v276
    %v559 = vunpack.c.l.b16 %v277
    %v560 = vunpack.c.h.b16 %v277
    %v561 = vunpack.c.l.b16 %v278
    %v562 = vunpack.c.h.b16 %v278
    %v563 = vunpack.c.l.b16 %v279
    %v564 = vunpack.c.h.b16 %v279
    %v565 = vunpack.c.l.b16 %v280
    %v566 = vunpack.c.h.b16 %v280
    %v567 = vunpack.c.l.b16 %v281
    %v568 = vunpack.c.h.b16 %v281
    %v569 = vunpack.c.l.b16 %v282
    %v570 = vunpack.c.h.b16 %v282
    %v571 = vunpack.c.l.b16 %v283
    %v572 = vunpack.c.h.b16 %v283
    %v573 = vunpack.c.l.b16 %v284
    %v574 = vunpack.c.h.b16 %v284
    %v575 = vunpack.c.l.b16 %v285
    %v576 = vunpack.c.h.b16 %v285
    %v577 = vunpack.c.l.b16 %v286
    %v578 = vunpack.c.h.b16 %v286
    %v579 = vunpack.c.l.b16 %v287
    %v580 = vunpack.c.h.b16 %v287
    %v581 = vunpack.c.l.b16 %v288
    %v582 = vunpack.c.h.b16 %v288
    %v583 = vunpack.c.l.b16 %v289
    %v584 = vunpack.c.h.b16 %v289
    %v585 = vunpack.c.l.b16 %v290
    %v586 = vunpack.c.h.b16 %v290
    %v587 = vunpack.c.l.b16 %v291
    %v588 = vunpack.c.h.b16 %v291
    %v589 = vunpack.c.l.b16 %v292
    %v590 = vunpack.c.h.b16 %v292
    %v591 = vunpack.c.l.b16 %v293
    %v592 = vunpack.c.h.b16 %v293
    %v593 = vunpack.c.l.b16 %v294
    %v594 = vunpack.c.h.b16 %v294
    %v595 = vunpack.c.l.b16 %v295
    %v596 = vunpack.c.h.b16 %v295
    %v597 = vunpack.c.l.b16 %v296
    %v598 = vunpack.c.h.b16 %v296
    %v599 = vunpack.c.l.b16 %v297
    %v600 = vunpack.c.h.b16 %v297
    %v601 = vunpack.c.l.b16 %v298
    %v602 = vunpack.c.h.b16 %v298
    %v603 = vunpack.c.l.b16 %v299
    %v604 = vunpack.c.h.b16 %v299
    %v605 = vunpack.c.l.b16 %v300
    %v606 = vunpack.c.h.b16 %v300
    %v607 = vunpack.c.l.b16 %v301
    %v608 = vunpack.c.h.b16 %v301
    %v609 = vunpack.c.l.b16 %v302
    %v610 = vunpack.c.h.b16 %v302
    %v611 = vunpack.c.l.b16 %v303
    %v612 = vunpack.c.h.b16 %v303
    %v613 = vunpack.c.l.b16 %v304
    %v614 = vunpack.c.h.b16 %v304
    %v615 = vunpack.c.l.b16 %v305
    %v616 = vunpack.c.h.b16 %v305
    %v617 = vunpack.c.l.b16 %v306
    %v618 = vunpack.c.h.b16 %v306
    %v619 = vunpack.c.l.b16 %v307
    %v620 = vunpack.c.h.b16 %v307
    %v621 = vunpack.c.l.b16 %v308
    %v622 = vunpack.c.h.b16 %v308
    %v623 = vunpack.c.l.b16 %v309
    %v624 = vunpack.c.h.b16 %v309
    %v625 = vunpack.c.l.b16 %v310
    %v626 = vunpack.c.h.b16 %v310
    %v627 = vunpack.c.l.b16 %v311
    %v628 = vunpack.c.h.b16 %v311
    %v629 = vunpack.c.l.b16 %v312
    %v630 = vunpack.c.h.b16 %v312
    %v631 = vunpack.c.l.b16 %v313
    %v632 = vunpack.c.h.b16 %v313
    %v633 = vunpack.c.l.b16 %v314
    %v634 = vunpack.c.h.b16 %v314
    %v635 = vunpack.c.l.b16 %v315
    %v636 = vunpack.c.h.b16 %v315
    %v637 = vunpack.c.l.b16 %v316
    %v638 = vunpack.c.h.b16 %v316
    %v639 = vunpack.c.l.b16 %v317
    %v640 = vunpack.c.h.b16 %v317
    %v641 = vunpack.c.l.b16 %v318
    %v642 = vunpack.c.h.b16 %v318
    %v643 = vunpack.c.l.b16 %v319
    %v644 = vunpack.c.h.b16 %v319
    %v645 = vunpack.c.l.b16 %v320
    %v646 = vunpack.c.h.b16 %v320
    %v647 = vunpack.c.l.b16 %v321
    %v648 = vunpack.c.h.b16 %v321
    %v649 = vunpack.c.l.b16 %v322
    %v650 = vunpack.c.h.b16 %v322
    %v651 = vunpack.c.l.b16 %v323
    %v652 = vunpack.c.h.b16 %v323
    %v653 = vunpack.c.l.b16 %v324
    %v654 = vunpack.c.h.b16 %v324
    %v655 = vunpack.c.l.b16 %v325
    %v656 = vunpack.c.h.b16 %v325
    %v657 = vunpack.c.l.b16 %v326
    %v658 = vunpack.c.h.b16 %v326
    %v659 = vunpack.c.l.b16 %v327
    %v660 = vunpack.c.h.b16 %v327
    %v661 = vunpack.c.l.b16 %v328
    %v662 = vunpack.c.h.b16 %v328
    %v663 = vunpack.c.l.b16 %v329
    %v664 = vunpack.c.h.b16 %v329
    %v665 = vunpack.c.l.b16 %v330
    %v666 = vunpack.c.h.b16 %v330
    %v667 = vunpack.c.l.b16 %v331
    %v668 = vunpack.c.h.b16 %v331
    %v669 = vunpack.c.l.b16 %v332
    %v670 = vunpack.c.h.b16 %v332
    %v671 = vunpack.c.l.b16 %v333
    %v672 = vunpack.c.h.b16 %v333
    %v673 = vunpack.c.l.b16 %v334
    %v674 = vunpack.c.h.b16 %v334
    %v675 = vunpack.c.l.b16 %v335
    %v676 = vunpack.c.h.b16 %v335
    %v677 = vunpack.c.l.b16 %v336
    %v678 = vunpack.c.h.b16 %v336
    %v679 = vunpack.c.l.b16 %v337
    %v680 = vunpack.c.h.b16 %v337
    %v681 = vunpack.c.l.b16 %v338
    %v682 = vunpack.c.h.b16 %v338
    %v683 = vunpack.c.l.b16 %v339
    %v684 = vunpack.c.h.b16 %v339
    %v685 = vunpack.c.l.b16 %v340
    %v686 = vunpack.c.h.b16 %v340
    %v687 = vunpack.c.l.b16 %v341
    %v688 = vunpack.c.h.b16 %v341
    %v689 = vunpack.c.l.b16 %v342
    %v690 = vunpack.c.h.b16 %v342
    %v691 = vunpack.c.l.b16 %v343
    %v692 = vunpack.c.h.b16 %v343
    %v693 = vunpack.c.l.b16 %v344
    %v694 = vunpack.c.h.b16 %v344
    %v695 = vunpack.c.l.b16 %v345
    %v696 = vunpack.c.h.b16 %v345
    %v697 = vunpack.c.l.b16 %v346
    %v698 = vunpack.c.h.b16 %v346
    %v699 = vunpack.c.l.b16 %v347
    %v700 = vunpack.c.h.b16 %v347
    %v701 = vunpack.c.l.b16 %v348
    %v702 = vunpack.c.h.b16 %v348
    %v703 = vunpack.c.l.b16 %v349
    %v704 = vunpack.c.h.b16 %v349
    %v705 = vunpack.c.l.b16 %v350
    %v706 = vunpack.c.h.b16 %v350
    %v707 = vunpack.c.l.b16 %v351
    %v708 = vunpack.c.h.b16 %v351
    %v709 = vunpack.c.l.b16 %v352
    %v710 = vunpack.c.h.b16 %v352
    %v711 = vunpack.c.l.b16 %v353
    %v712 = vunpack.c.h.b16 %v353
    %v713 = vunpack.c.l.b16 %v354
    %v714 = vunpack.c.h.b16 %v354
    %v715 = vunpack.c.l.b16 %v355
    %v716 = vunpack.c.h.b16 %v355
    %v717 = vunpack.c.l.b16 %v356
    %v718 = vunpack.c.h.b16 %v356
    %v719 = vunpack.c.l.b16 %v357
    %v720 = vunpack.c.h.b16 %v357
    %v721 = vunpack.c.l.b16 %v358
    %v722 = vunpack.c.h.b16 %v358
    %v723 = vunpack.c.l.b16 %v359
    %v724 = vunpack.c.h.b16 %v359
    %v725 = vunpack.c.l.b16 %v360
    %v726 = vunpack.c.h.b16 %v360
    %v727 = vunpack.c.l.b16 %v361
    %v728 = vunpack.c.h.b16 %v361
    %v729 = vunpack.c.l.b16 %v362
    %v730 = vunpack.c.h.b16 %v362
    %v731 = vunpack.c.l.b16 %v363
    %v732 = vunpack.c.h.b16 %v363
    %v733 = vunpack.c.l.b16 %v364
    %v734 = vunpack.c.h.b16 %v364
    %v735 = vunpack.c.l.b16 %v365
    %v736 = vunpack.c.h.b16 %v365
    %v737 = vunpack.c.l.b16 %v366
    %v738 = vunpack.c.h.b16 %v366
    %v739 = vunpack.c.l.b16 %v367
    %v740 = vunpack.c.h.b16 %v367
    %v741 = vunpack.c.l.b16 %v368
    %v742 = vunpack.c.h.b16 %v368
    %v743 = vunpack.c.l.b16 %v369
    %v744 = vunpack.c.h.b16 %v369
    %v745 = vunpack.c.l.b16 %v370
    %v746 = vunpack.c.h.b16 %v370
    %v747 = vunpack.c.l.b16 %v371
    %v748 = vunpack.c.h.b16 %v371
    %v749 = vunpack.c.l.b16 %v372
    %v750 = vunpack.c.h.b16 %v372
    %v751 = vunpack.c.l.b16 %v373
    %v752 = vunpack.c.h.b16 %v373
    %v753 = vunpack.c.l.b16 %v374
    %v754 = vunpack.c.h.b16 %v374
    %v755 = vunpack.c.l.b16 %v375
    %v756 = vunpack.c.h.b16 %v375
    %v757 = vunpack.c.l.b16 %v376
    %v758 = vunpack.c.h.b16 %v376
    %v759 = vunpack.c.l.b16 %v377
    %v760 = vunpack.c.h.b16 %v377
    %v761 = vunpack.c.l.b16 %v378
    %v762 = vunpack.c.h.b16 %v378
    %v763 = vunpack.c.l.b16 %v379
    %v764 = vunpack.c.h.b16 %v379
    %v765 = vunpack.c.l.b16 %v380
    %v766 = vunpack.c.h.b16 %v380
    %v767 = vunpack.c.l.b16 %v381
    %v768 = vunpack.c.h.b16 %v381
    %v769 = vunpack.c.l.b16 %v382
    %v770 = vunpack.c.h.b16 %v382
    %v771 = vunpack.c.l.b16 %v383
    %v772 = vunpack.c.h.b16 %v383
    %v773 = vunpack.c.l.b16 %v384
    %v774 = vunpack.c.h.b16 %v384
    %v775 = vunpack.c.l.b16 %v385
    %v776 = vunpack.c.h.b16 %v385
    %v777 = vunpack.c.l.b16 %v386
    %v778 = vunpack.c.h.b16 %v386
    %v779 = vunpack.c.l.b16 %v387
    %v780 = vunpack.c.h.b16 %v387
    %v781 = vunpack.c.l.b16 %v388
    %v782 = vunpack.c.h.b16 %v388
    %v783 = vunpack.c.l.b16 %v389
    %v784 = vunpack.c.h.b16 %v389
    %v785 = vunpack.c.l.b16 %v390
    %v786 = vunpack.c.h.b16 %v390
    %v787 = vunpack.c.l.b16 %v391
    %v788 = vunpack.c.h.b16 %v391
    %v789 = vunpack.c.l.b16 %v392
    %v790 = vunpack.c.h.b16 %v392
    %v791 = vunpack.c.l.b16 %v393
    %v792 = vunpack.c.h.b16 %v393
    %v793 = vunpack.c.l.b16 %v394
    %v794 = vunpack.c.h.b16 %v394
    %v795 = vunpack.c.l.b16 %v395
    %v796 = vunpack.c.h.b16 %v395
    %v797 = vunpack.c.l.b16 %v396
    %v798 = vunpack.c.h.b16 %v396
    %v799 = vunpack.c.l.b16 %v397
    %v800 = vunpack.c.h.b16 %v397
    %v801 = vunpack.c.l.b16 %v398
    %v802 = vunpack.c.h.b16 %v398
    %v803 = vunpack.c.l.b16 %v399
    %v804 = vunpack.c.h.b16 %v399
    %v805 = vunpack.c.l.b16 %v400
    %v806 = vunpack.c.h.b16 %v400
    %v807 = vpack.c.b16 %v555, %v551
    %v808 = vpack.c.b16 %v556, %v552
    %v809 = vpack.c.b16 %v557, %v553
    %v810 = vpack.c.b16 %v558, %v554
    %v811 = vpack.c.b16 %v563, %v559
    %v812 = vpack.c.b16 %v564, %v560
    %v813 = vpack.c.b16 %v565, %v561
    %v814 = vpack.c.b16 %v566, %v562
    %v815 = vpack.c.b16 %v571, %v567
    %v816 = vpack.c.b16 %v572, %v568
    %v817 = vpack.c.b16 %v573, %v569
    %v818 = vpack.c.b16 %v574, %v570
    %v819 = vpack.c.b16 %v579, %v575
    %v820 = vpack.c.b16 %v580, %v576
    %v821 = vpack.c.b16 %v581, %v577
    %v822 = vpack.c.b16 %v582, %v578
    %v823 = vpack.c.b16 %v587, %v583
    %v824 = vpack.c.b16 %v588, %v584
    %v825 = vpack.c.b16 %v589, %v585
    %v826 = vpack.c.b16 %v590, %v586
    %v827 = vpack.c.b16 %v595, %v591
    %v828 = vpack.c.b16 %v596, %v592
    %v829 = vpack.c.b16 %v597, %v593
    %v830 = vpack.c.b16 %v598, %v594
    %v831 = vpack.c.b16 %v603, %v599
    %v832 = vpack.c.b16 %v604, %v600
    %v833 = vpack.c.b16 %v605, %v601
    %v834 = vpack.c.b16 %v606, %v602
    %v835 = vpack.c.b16 %v611, %v607
    %v836 = vpack.c.b16 %v612, %v608
    %v837 = vpack.c.b16 %v613, %v609
    %v838 = vpack.c.b16 %v614, %v610
    %v839 = vpack.c.b16 %v619, %v615
    %v840 = vpack.c.b16 %v620, %v616
    %v841 = vpack.c.b16 %v621, %v617
    %v842 = vpack.c.b16 %v622, %v618
    %v843 = vpack.c.b16 %v627, %v623
    %v844 = vpack.c.b16 %v628, %v624
    %v845 = vpack.c.b16 %v629, %v625
    %v846 = vpack.c.b16 %v630, %v626
    %v847 = vpack.c.b16 %v635, %v631
    %v848 = vpack.c.b16 %v636, %v632
    %v849 = vpack.c.b16 %v637, %v633
    %v850 = vpack.c.b16 %v638, %v634
    %v851 = vpack.c.b16 %v643, %v639
    %v852 = vpack.c.b16 %v644, %v640
    %v853 = vpack.c.b16 %v645, %v641
    %v854 = vpack.c.b16 %v646, %v642
    %v855 = vpack.c.b16 %v651, %v647
    %v856 = vpack.c.b16 %v652, %v648
    %v857 = vpack.c.b16 %v653, %v649
    %v858 = vpack.c.b16 %v654, %v650
    %v859 = vpack.c.b16 %v659, %v655
    %v860 = vpack.c.b16 %v660, %v656
    %v861 = vpack.c.b16 %v661, %v657
    %v862 = vpack.c.b16 %v662, %v658
    %v863 = vpack.c.b16 %v667, %v663
    %v864 = vpack.c.b16 %v668, %v664
    %v865 = vpack.c.b16 %v669, %v665
    %v866 = vpack.c.b16 %v670, %v666
    %v867 = vpack.c.b16 %v675, %v671
    %v868 = vpack.c.b16 %v676, %v672
    %v869 = vpack.c.b16 %v677, %v673
    %v870 = vpack.c.b16 %v678, %v674
    %v871 = vpack.c.b16 %v683, %v679
    %v872 = vpack.c.b16 %v684, %v680
    %v873 = vpack.c.b16 %v685, %v681
    %v874 = vpack.c.b16 %v686, %v682
    %v875 = vpack.c.b16 %v691, %v687
    %v876 = vpack.c.b16 %v692, %v688
    %v877 = vpack.c.b16 %v693, %v689
    %v878 = vpack.c.b16 %v694, %v690
    %v879 = vpack.c.b16 %v699, %v695
    %v880 = vpack.c.b16 %v700, %v696
    %v881 = vpack.c.b16 %v701, %v697
    %v882 = vpack.c.b16 %v702, %v698
    %v883 = vpack.c.b16 %v707, %v703
    %v884 = vpack.c.b16 %v708, %v704
    %v885 = vpack.c.b16 %v709, %v705
    %v886 = vpack.c.b16 %v710, %v706
    %v887 = vpack.c.b16 %v715, %v711
    %v888 = vpack.c.b16 %v716, %v712
    %v889 = vpack.c.b16 %v717, %v713
    %v890 = vpack.c.b16 %v718, %v714
    %v891 = vpack.c.b16 %v723, %v719
    %v892 = vpack.c.b16 %v724, %v720
    %v893 = vpack.c.b16 %v725, %v721
    %v894 = vpack.c.b16 %v726, %v722
    %v895 = vpack.c.b16 %v731, %v727
    %v896 = vpack.c.b16 %v732, %v728
    %v897 = vpack.c.b16 %v733, %v729
    %v898 = vpack.c.b16 %v734, %v730
    %v899 = vpack.c.b16 %v739, %v735
    %v900 = vpack.c.b16 %v740, %v736
    %v901 = vpack.c.b16 %v741, %v737
    %v902 = vpack.c.b16 %v742, %v738
    %v903 = vpack.c.b16 %v747, %v743
    %v904 = vpack.c.b16 %v748, %v744
    %v905 = vpack.c.b16 %v749, %v745
    %v906 = vpack.c.b16 %v750, %v746
    %v907 = vpack.c.b16 %v755, %v751
    %v908 = vpack.c.b16 %v756, %v752
    %v909 = vpack.c.b16 %v757, %v753
    %v910 = vpack.c.b16 %v758, %v754
    %v911 = vpack.c.b16 %v763, %v759
    %v912 = vpack.c.b16 %v764, %v760
    %v913 = vpack.c.b16 %v765, %v761
    %v914 = vpack.c.b16 %v766, %v762
    %v915 = vpack.c.b16 %v771, %v767
    %v916 = vpack.c.b16 %v772, %v768
    %v917 = vpack.c.b16 %v773, %v769
    %v918 = vpack.c.b16 %v774, %v770
    %v919 = vpack.c.b16 %v779, %v775
    %v920 = vpack.c.b16 %v780, %v776
    %v921 = vpack.c.b16 %v781, %v777
    %v922 = vpack.c.b16 %v782, %v778
    %v923 = vpack.c.b16 %v787, %v783
    %v924 = vpack.c.b16 %v788, %v784
    %v925 = vpack.c.b16 %v789, %v785
    %v926 = vpack.c.b16 %v790, %v786
    %v927 = vpack.c.b16 %v795, %v791
    %v928 = vpack.c.b16 %v796, %v792
    %v929 = vpack.c.b16 %v797, %v793
    %v930 = vpack.c.b16 %v798, %v794
    %v931 = vpack.c.b16 %v803, %v799
    %v932 = vpack.c.b16 %v804, %v800
    %v933 = vpack.c.b16 %v805, %v801
    %v934 = vpack.c.b16 %v806, %v802
    %1063 = vmatprep.subr.bf16.mxu0 %v836
    %1064 = vmatpush1.bf16.msra.mxu0 %v835
    %1065 = vmatprep.subr.bf16.mxu0 %v832
    %1066 = vmatpush1.bf16.msra.mxu0 %v831
    %1067 = vmatprep.subr.bf16.mxu0 %v828
    %1068 = vmatpush1.bf16.msra.mxu0 %v827
    %1069 = vmatprep.subr.bf16.mxu0 %v824
    %1070 = vmatpush1.bf16.msra.mxu0 %v823
    %1071 = vmatprep.subr.bf16.mxu0 %v820
    %1072 = vmatpush1.bf16.msra.mxu0 %v819
    %1073 = vmatprep.subr.bf16.mxu0 %v816
    %1074 = vmatpush1.bf16.msra.mxu0 %v815
    %1075 = vmatprep.subr.bf16.mxu0 %v812
    %1076 = vmatpush1.bf16.msra.mxu0 %v811
    %1077 = vmatprep.subr.bf16.mxu0 %v808
    %1078 = vmatpush1.bf16.msra.mxu0 %v807
    %1079 = vmatprep.subr.bf16.mxu0 %v868
    %1080 = vmatpush2.bf16.msra.mxu0 %v867
    %1081 = vmatprep.subr.bf16.mxu0 %v864
    %1082 = vmatpush2.bf16.msra.mxu0 %v863
    %1083 = vmatprep.subr.bf16.mxu0 %v860
    %1084 = vmatpush2.bf16.msra.mxu0 %v859
    %1085 = vmatprep.subr.bf16.mxu0 %v856
    %1086 = vmatpush2.bf16.msra.mxu0 %v855
    %1087 = vmatprep.subr.bf16.mxu0 %v852
    %1088 = vmatpush2.bf16.msra.mxu0 %v851
    %1089 = vmatprep.subr.bf16.mxu0 %v848
    %1090 = vmatpush2.bf16.msra.mxu0 %v847
    %1091 = vmatprep.subr.bf16.mxu0 %v844
    %1092 = vmatpush2.bf16.msra.mxu0 %v843
    %1093 = vmatprep.subr.bf16.mxu0 %v840
    %1094 = vmatpush2.bf16.msra.mxu0 %v839
    %1095 = vmatprep.mubr.bf16.mxu0 %v270
    %1096 = vmatmul.mubr.bf16.gmra.mxu0 %v269
    %v1097 = vpop.f32.mrf.mxu0
    %v1098 = vadd.f32 %v406, %v1097
    %v1099 = vpop.f32.mrf.mxu0
    %v1100 = vadd.f32 %v410, %v1099
    %v1101 = vpop.f32.mrf.mxu0
    %v1102 = vpop.f32.mrf.mxu0
    %1103 = vdwg.mxu0
    %1104 = vmatprep.subr.bf16.mxu0 %v900
    %1105 = vmatpush1.bf16.msra.mxu0 %v899
    %1106 = vmatprep.subr.bf16.mxu0 %v896
    %1107 = vmatpush1.bf16.msra.mxu0 %v895
    %1108 = vmatprep.subr.bf16.mxu0 %v892
    %1109 = vmatpush1.bf16.msra.mxu0 %v891
    %1110 = vmatprep.subr.bf16.mxu0 %v888
    %1111 = vmatpush1.bf16.msra.mxu0 %v887
    %1112 = vmatprep.subr.bf16.mxu0 %v884
    %1113 = vmatpush1.bf16.msra.mxu0 %v883
    %1114 = vmatprep.subr.bf16.mxu0 %v880
    %1115 = vmatpush1.bf16.msra.mxu0 %v879
    %1116 = vmatprep.subr.bf16.mxu0 %v876
    %1117 = vmatpush1.bf16.msra.mxu0 %v875
    %1118 = vmatprep.subr.bf16.mxu0 %v872
    %1119 = vmatpush1.bf16.msra.mxu0 %v871
    %1120 = vmatprep.subr.bf16.mxu0 %v932
    %1121 = vmatpush2.bf16.msra.mxu0 %v931
    %1122 = vmatprep.subr.bf16.mxu0 %v928
    %1123 = vmatpush2.bf16.msra.mxu0 %v927
    %1124 = vmatprep.subr.bf16.mxu0 %v924
    %1125 = vmatpush2.bf16.msra.mxu0 %v923
    %1126 = vmatprep.subr.bf16.mxu0 %v920
    %1127 = vmatpush2.bf16.msra.mxu0 %v919
    %1128 = vmatprep.subr.bf16.mxu0 %v916
    %1129 = vmatpush2.bf16.msra.mxu0 %v915
    %1130 = vmatprep.subr.bf16.mxu0 %v912
    %1131 = vmatpush2.bf16.msra.mxu0 %v911
    %1132 = vmatprep.subr.bf16.mxu0 %v908
    %1133 = vmatpush2.bf16.msra.mxu0 %v907
    %1134 = vmatprep.subr.bf16.mxu0 %v904
    %1135 = vmatpush2.bf16.msra.mxu0 %v903
    %1136 = vmatprep.mubr.bf16.mxu0 %v272
    %1137 = vmatmul.mubr.bf16.gmra.mxu0 %v271
    %v1138 = vpop.f32.mrf.mxu0
    %v1139 = vadd.f32 %v1098, %v1138
    %v1140 = vpop.f32.mrf.mxu0
    %v1141 = vadd.f32 %v1100, %v1140
    %v1142 = vpop.f32.mrf.mxu0
    %v1143 = vpop.f32.mrf.mxu0
    %1144 = vdwg.mxu0
    %1145 = vmatprep.subr.bf16.mxu0 %v838
    %1146 = vmatpush1.bf16.msra.mxu0 %v837
    %1147 = vmatprep.subr.bf16.mxu0 %v834
    %1148 = vmatpush1.bf16.msra.mxu0 %v833
    %1149 = vmatprep.subr.bf16.mxu0 %v830
    %1150 = vmatpush1.bf16.msra.mxu0 %v829
    %1151 = vmatprep.subr.bf16.mxu0 %v826
    %1152 = vmatpush1.bf16.msra.mxu0 %v825
    %1153 = vmatprep.subr.bf16.mxu0 %v822
    %1154 = vmatpush1.bf16.msra.mxu0 %v821
    %1155 = vmatprep.subr.bf16.mxu0 %v818
    %1156 = vmatpush1.bf16.msra.mxu0 %v817
    %1157 = vmatprep.subr.bf16.mxu0 %v814
    %1158 = vmatpush1.bf16.msra.mxu0 %v813
    %1159 = vmatprep.subr.bf16.mxu0 %v810
    %1160 = vmatpush1.bf16.msra.mxu0 %v809
    %1161 = vmatprep.subr.bf16.mxu0 %v870
    %1162 = vmatpush2.bf16.msra.mxu0 %v869
    %1163 = vmatprep.subr.bf16.mxu0 %v866
    %1164 = vmatpush2.bf16.msra.mxu0 %v865
    %1165 = vmatprep.subr.bf16.mxu0 %v862
    %1166 = vmatpush2.bf16.msra.mxu0 %v861
    %1167 = vmatprep.subr.bf16.mxu0 %v858
    %1168 = vmatpush2.bf16.msra.mxu0 %v857
    %1169 = vmatprep.subr.bf16.mxu0 %v854
    %1170 = vmatpush2.bf16.msra.mxu0 %v853
    %1171 = vmatprep.subr.bf16.mxu0 %v850
    %1172 = vmatpush2.bf16.msra.mxu0 %v849
    %1173 = vmatprep.subr.bf16.mxu0 %v846
    %1174 = vmatpush2.bf16.msra.mxu0 %v845
    %1175 = vmatprep.subr.bf16.mxu0 %v842
    %1176 = vmatpush2.bf16.msra.mxu0 %v841
    %1177 = vmatprep.mubr.bf16.mxu0 %v270
    %1178 = vmatmul.mubr.bf16.gmra.mxu0 %v269
    %v1179 = vpop.f32.mrf.mxu0
    %v1180 = vadd.f32 %v414, %v1179
    %v1181 = vpop.f32.mrf.mxu0
    %v1182 = vadd.f32 %v418, %v1181
    %v1183 = vpop.f32.mrf.mxu0
    %v1184 = vpop.f32.mrf.mxu0
    %1185 = vdwg.mxu0
    %1186 = vmatprep.subr.bf16.mxu0 %v902
    %1187 = vmatpush1.bf16.msra.mxu0 %v901
    %1188 = vmatprep.subr.bf16.mxu0 %v898
    %1189 = vmatpush1.bf16.msra.mxu0 %v897
    %1190 = vmatprep.subr.bf16.mxu0 %v894
    %1191 = vmatpush1.bf16.msra.mxu0 %v893
    %1192 = vmatprep.subr.bf16.mxu0 %v890
    %1193 = vmatpush1.bf16.msra.mxu0 %v889
    %1194 = vmatprep.subr.bf16.mxu0 %v886
    %1195 = vmatpush1.bf16.msra.mxu0 %v885
    %1196 = vmatprep.subr.bf16.mxu0 %v882
    %1197 = vmatpush1.bf16.msra.mxu0 %v881
    %1198 = vmatprep.subr.bf16.mxu0 %v878
    %1199 = vmatpush1.bf16.msra.mxu0 %v877
    %1200 = vmatprep.subr.bf16.mxu0 %v874
    %1201 = vmatpush1.bf16.msra.mxu0 %v873
    %1202 = vmatprep.subr.bf16.mxu0 %v934
    %1203 = vmatpush2.bf16.msra.mxu0 %v933
    %1204 = vmatprep.subr.bf16.mxu0 %v930
    %1205 = vmatpush2.bf16.msra.mxu0 %v929
    %1206 = vmatprep.subr.bf16.mxu0 %v926
    %1207 = vmatpush2.bf16.msra.mxu0 %v925
    %1208 = vmatprep.subr.bf16.mxu0 %v922
    %1209 = vmatpush2.bf16.msra.mxu0 %v921
    %1210 = vmatprep.subr.bf16.mxu0 %v918
    %1211 = vmatpush2.bf16.msra.mxu0 %v917
    %1212 = vmatprep.subr.bf16.mxu0 %v914
    %1213 = vmatpush2.bf16.msra.mxu0 %v913
    %1214 = vmatprep.subr.bf16.mxu0 %v910
    %1215 = vmatpush2.bf16.msra.mxu0 %v909
    %1216 = vmatprep.subr.bf16.mxu0 %v906
    %1217 = vmatpush2.bf16.msra.mxu0 %v905
    %1218 = vmatprep.mubr.bf16.mxu0 %v272
    %1219 = vmatmul.mubr.bf16.gmra.mxu0 %v271
    %v1220 = vpop.f32.mrf.mxu0
    %v1221 = vadd.f32 %v1180, %v1220
    %v1222 = vpop.f32.mrf.mxu0
    %v1223 = vadd.f32 %v1182, %v1222
    %v1224 = vpop.f32.mrf.mxu0
    %v1225 = vpop.f32.mrf.mxu0
    %1226 = vdwg.mxu0
    %v1227 = vmax.f32 %v1139, 0.0
    %v1228 = vmax.f32 %v1141, 0.0
    %v1229 = vmax.f32 %v1221, 0.0
    %v1230 = vmax.f32 %v1223, 0.0
    %v1231 = vpack.c.bf16 %v1227, %v1227
    %v1232 = vpack.c.bf16 %v1228, %v1228
    %v1233 = vpack.c.bf16 %v1229, %v1229
    %v1234 = vpack.c.bf16 %v1230, %v1230
    %v1235 = vld [vmem:[#allocation10] sm:$0xf]
    %v1236 = vld [vmem:[#allocation10 + $0x4] sm:$0xf]
    %v1237 = vld [vmem:[#allocation10 + $0x8] sm:$0xf]
    %v1238 = vld [vmem:[#allocation10 + $0xc] sm:$0xf]
    %v1239 = vld [vmem:[#allocation10 + $0x10] sm:$0xf]
    %v1240 = vld [vmem:[#allocation10 + $0x14] sm:$0xf]
    %v1241 = vld [vmem:[#allocation10 + $0x18] sm:$0xf]
    %v1242 = vld [vmem:[#allocation10 + $0x1c] sm:$0xf]
    %v1243 = vld [vmem:[#allocation10 + $0x20] sm:$0xf]
    %v1244 = vld [vmem:[#allocation10 + $0x24] sm:$0xf]
    %v1245 = vld [vmem:[#allocation10 + $0x28] sm:$0xf]
    %v1246 = vld [vmem:[#allocation10 + $0x2c] sm:$0xf]
    %v1247 = vld [vmem:[#allocation10 + $0x30] sm:$0xf]
    %v1248 = vld [vmem:[#allocation10 + $0x34] sm:$0xf]
    %v1249 = vld [vmem:[#allocation10 + $0x38] sm:$0xf]
    %v1250 = vld [vmem:[#allocation10 + $0x3c] sm:$0xf]
    %v1251 = vld [vmem:[#allocation10 + $0x40] sm:$0xf]
    %v1252 = vld [vmem:[#allocation10 + $0x44] sm:$0xf]
    %v1253 = vld [vmem:[#allocation10 + $0x48] sm:$0xf]
    %v1254 = vld [vmem:[#allocation10 + $0x4c] sm:$0xf]
    %v1255 = vld [vmem:[#allocation10 + $0x50] sm:$0xf]
    %v1256 = vld [vmem:[#allocation10 + $0x54] sm:$0xf]
    %v1257 = vld [vmem:[#allocation10 + $0x58] sm:$0xf]
    %v1258 = vld [vmem:[#allocation10 + $0x5c] sm:$0xf]
    %v1259 = vld [vmem:[#allocation10 + $0x60] sm:$0xf]
    %v1260 = vld [vmem:[#allocation10 + $0x64] sm:$0xf]
    %v1261 = vld [vmem:[#allocation10 + $0x68] sm:$0xf]
    %v1262 = vld [vmem:[#allocation10 + $0x6c] sm:$0xf]
    %v1263 = vld [vmem:[#allocation10 + $0x70] sm:$0xf]
    %v1264 = vld [vmem:[#allocation10 + $0x74] sm:$0xf]
    %v1265 = vld [vmem:[#allocation10 + $0x78] sm:$0xf]
    %v1266 = vld [vmem:[#allocation10 + $0x7c] sm:$0xf]
    %v1267 = vld [vmem:[#allocation10 + $0x80] sm:$0xf]
    %v1268 = vld [vmem:[#allocation10 + $0x84] sm:$0xf]
    %v1269 = vld [vmem:[#allocation10 + $0x88] sm:$0xf]
    %v1270 = vld [vmem:[#allocation10 + $0x8c] sm:$0xf]
    %v1271 = vld [vmem:[#allocation10 + $0x90] sm:$0xf]
    %v1272 = vld [vmem:[#allocation10 + $0x94] sm:$0xf]
    %v1273 = vld [vmem:[#allocation10 + $0x98] sm:$0xf]
    %v1274 = vld [vmem:[#allocation10 + $0x9c] sm:$0xf]
    %v1275 = vld [vmem:[#allocation10 + $0xa0] sm:$0xf]
    %v1276 = vld [vmem:[#allocation10 + $0xa4] sm:$0xf]
    %v1277 = vld [vmem:[#allocation10 + $0xa8] sm:$0xf]
    %v1278 = vld [vmem:[#allocation10 + $0xac] sm:$0xf]
    %v1279 = vld [vmem:[#allocation10 + $0xb0] sm:$0xf]
    %v1280 = vld [vmem:[#allocation10 + $0xb4] sm:$0xf]
    %v1281 = vld [vmem:[#allocation10 + $0xb8] sm:$0xf]
    %v1282 = vld [vmem:[#allocation10 + $0xbc] sm:$0xf]
    %v1283 = vld [vmem:[#allocation10 + $0xc0] sm:$0xf]
    %v1284 = vld [vmem:[#allocation10 + $0xc4] sm:$0xf]
    %v1285 = vld [vmem:[#allocation10 + $0xc8] sm:$0xf]
    %v1286 = vld [vmem:[#allocation10 + $0xcc] sm:$0xf]
    %v1287 = vld [vmem:[#allocation10 + $0xd0] sm:$0xf]
    %v1288 = vld [vmem:[#allocation10 + $0xd4] sm:$0xf]
    %v1289 = vld [vmem:[#allocation10 + $0xd8] sm:$0xf]
    %v1290 = vld [vmem:[#allocation10 + $0xdc] sm:$0xf]
    %v1291 = vld [vmem:[#allocation10 + $0xe0] sm:$0xf]
    %v1292 = vld [vmem:[#allocation10 + $0xe4] sm:$0xf]
    %v1293 = vld [vmem:[#allocation10 + $0xe8] sm:$0xf]
    %v1294 = vld [vmem:[#allocation10 + $0xec] sm:$0xf]
    %v1295 = vld [vmem:[#allocation10 + $0xf0] sm:$0xf]
    %v1296 = vld [vmem:[#allocation10 + $0xf4] sm:$0xf]
    %v1297 = vld [vmem:[#allocation10 + $0xf8] sm:$0xf]
    %v1298 = vld [vmem:[#allocation10 + $0xfc] sm:$0xf]
    %v1299 = vld [vmem:[%s6] sm:$0x1]
    %v1301 = vlaneseq
    %v1302 = vshrl.u32 %v1301, 7
    %v1303 = vsub.s32 0, %v1302
    %v1304 = vrot.slane %v1299, %v1303
    %v1370 = vunpack.c.l.b16 %v1235
    %v1371 = vunpack.c.l.b16 %v1236
    %v1372 = vunpack.c.l.b16 %v1237
    %v1373 = vunpack.c.l.b16 %v1238
    %v1374 = vunpack.c.l.b16 %v1239
    %v1375 = vunpack.c.l.b16 %v1240
    %v1376 = vunpack.c.l.b16 %v1241
    %v1377 = vunpack.c.l.b16 %v1242
    %v1378 = vunpack.c.l.b16 %v1243
    %v1379 = vunpack.c.l.b16 %v1244
    %v1380 = vunpack.c.l.b16 %v1245
    %v1381 = vunpack.c.l.b16 %v1246
    %v1382 = vunpack.c.l.b16 %v1247
    %v1383 = vunpack.c.l.b16 %v1248
    %v1384 = vunpack.c.l.b16 %v1249
    %v1385 = vunpack.c.l.b16 %v1250
    %v1386 = vunpack.c.l.b16 %v1251
    %v1387 = vunpack.c.l.b16 %v1252
    %v1388 = vunpack.c.l.b16 %v1253
    %v1389 = vunpack.c.l.b16 %v1254
    %v1390 = vunpack.c.l.b16 %v1255
    %v1391 = vunpack.c.l.b16 %v1256
    %v1392 = vunpack.c.l.b16 %v1257
    %v1393 = vunpack.c.l.b16 %v1258
    %v1394 = vunpack.c.l.b16 %v1259
    %v1395 = vunpack.c.l.b16 %v1260
    %v1396 = vunpack.c.l.b16 %v1261
    %v1397 = vunpack.c.l.b16 %v1262
    %v1398 = vunpack.c.l.b16 %v1263
    %v1399 = vunpack.c.l.b16 %v1264
    %v1400 = vunpack.c.l.b16 %v1265
    %v1401 = vunpack.c.l.b16 %v1266
    %v1402 = vunpack.c.l.b16 %v1267
    %v1403 = vunpack.c.l.b16 %v1268
    %v1404 = vunpack.c.l.b16 %v1269
    %v1405 = vunpack.c.l.b16 %v1270
    %v1406 = vunpack.c.l.b16 %v1271
    %v1407 = vunpack.c.l.b16 %v1272
    %v1408 = vunpack.c.l.b16 %v1273
    %v1409 = vunpack.c.l.b16 %v1274
    %v1410 = vunpack.c.l.b16 %v1275
    %v1411 = vunpack.c.l.b16 %v1276
    %v1412 = vunpack.c.l.b16 %v1277
    %v1413 = vunpack.c.l.b16 %v1278
    %v1414 = vunpack.c.l.b16 %v1279
    %v1415 = vunpack.c.l.b16 %v1280
    %v1416 = vunpack.c.l.b16 %v1281
    %v1417 = vunpack.c.l.b16 %v1282
    %v1418 = vunpack.c.l.b16 %v1283
    %v1419 = vunpack.c.l.b16 %v1284
    %v1420 = vunpack.c.l.b16 %v1285
    %v1421 = vunpack.c.l.b16 %v1286
    %v1422 = vunpack.c.l.b16 %v1287
    %v1423 = vunpack.c.l.b16 %v1288
    %v1424 = vunpack.c.l.b16 %v1289
    %v1425 = vunpack.c.l.b16 %v1290
    %v1426 = vunpack.c.l.b16 %v1291
    %v1427 = vunpack.c.l.b16 %v1292
    %v1428 = vunpack.c.l.b16 %v1293
    %v1429 = vunpack.c.l.b16 %v1294
    %v1430 = vunpack.c.l.b16 %v1295
    %v1431 = vunpack.c.l.b16 %v1296
    %v1432 = vunpack.c.l.b16 %v1297
    %v1433 = vunpack.c.l.b16 %v1298
    %v1434 = vpack.c.b16 %v1371, %v1370
    %v1435 = vpack.c.b16 %v1373, %v1372
    %v1436 = vpack.c.b16 %v1375, %v1374
    %v1437 = vpack.c.b16 %v1377, %v1376
    %v1438 = vpack.c.b16 %v1379, %v1378
    %v1439 = vpack.c.b16 %v1381, %v1380
    %v1440 = vpack.c.b16 %v1383, %v1382
    %v1441 = vpack.c.b16 %v1385, %v1384
    %v1442 = vpack.c.b16 %v1387, %v1386
    %v1443 = vpack.c.b16 %v1389, %v1388
    %v1444 = vpack.c.b16 %v1391, %v1390
    %v1445 = vpack.c.b16 %v1393, %v1392
    %v1446 = vpack.c.b16 %v1395, %v1394
    %v1447 = vpack.c.b16 %v1397, %v1396
    %v1448 = vpack.c.b16 %v1399, %v1398
    %v1449 = vpack.c.b16 %v1401, %v1400
    %v1450 = vpack.c.b16 %v1403, %v1402
    %v1451 = vpack.c.b16 %v1405, %v1404
    %v1452 = vpack.c.b16 %v1407, %v1406
    %v1453 = vpack.c.b16 %v1409, %v1408
    %v1454 = vpack.c.b16 %v1411, %v1410
    %v1455 = vpack.c.b16 %v1413, %v1412
    %v1456 = vpack.c.b16 %v1415, %v1414
    %v1457 = vpack.c.b16 %v1417, %v1416
    %v1458 = vpack.c.b16 %v1419, %v1418
    %v1459 = vpack.c.b16 %v1421, %v1420
    %v1460 = vpack.c.b16 %v1423, %v1422
    %v1461 = vpack.c.b16 %v1425, %v1424
    %v1462 = vpack.c.b16 %v1427, %v1426
    %v1463 = vpack.c.b16 %v1429, %v1428
    %v1464 = vpack.c.b16 %v1431, %v1430
    %v1465 = vpack.c.b16 %v1433, %v1432
    %1498 = vmatprep.subr.bf16.mxu0 0
    %1499 = vmatpush1.bf16.msra.mxu0 %v1441
    %1500 = vmatprep.subr.bf16.mxu0 0
    %1501 = vmatpush1.bf16.msra.mxu0 %v1440
    %1502 = vmatprep.subr.bf16.mxu0 0
    %1503 = vmatpush1.bf16.msra.mxu0 %v1439
    %1504 = vmatprep.subr.bf16.mxu0 0
    %1505 = vmatpush1.bf16.msra.mxu0 %v1438
    %1506 = vmatprep.subr.bf16.mxu0 0
    %1507 = vmatpush1.bf16.msra.mxu0 %v1437
    %1508 = vmatprep.subr.bf16.mxu0 0
    %1509 = vmatpush1.bf16.msra.mxu0 %v1436
    %1510 = vmatprep.subr.bf16.mxu0 0
    %1511 = vmatpush1.bf16.msra.mxu0 %v1435
    %1512 = vmatprep.subr.bf16.mxu0 0
    %1513 = vmatpush1.bf16.msra.mxu0 %v1434
    %1514 = vmatprep.subr.bf16.mxu0 0
    %1515 = vmatpush2.bf16.msra.mxu0 %v1449
    %1516 = vmatprep.subr.bf16.mxu0 0
    %1517 = vmatpush2.bf16.msra.mxu0 %v1448
    %1518 = vmatprep.subr.bf16.mxu0 0
    %1519 = vmatpush2.bf16.msra.mxu0 %v1447
    %1520 = vmatprep.subr.bf16.mxu0 0
    %1521 = vmatpush2.bf16.msra.mxu0 %v1446
    %1522 = vmatprep.subr.bf16.mxu0 0
    %1523 = vmatpush2.bf16.msra.mxu0 %v1445
    %1524 = vmatprep.subr.bf16.mxu0 0
    %1525 = vmatpush2.bf16.msra.mxu0 %v1444
    %1526 = vmatprep.subr.bf16.mxu0 0
    %1527 = vmatpush2.bf16.msra.mxu0 %v1443
    %1528 = vmatprep.subr.bf16.mxu0 0
    %1529 = vmatpush2.bf16.msra.mxu0 %v1442
    %1530 = vmatprep.mubr.bf16.mxu0 %v1232
    %1531 = vmatmul.mubr.bf16.gmra.mxu0 %v1231
    %v1532 = vpop.f32.mrf.mxu0
    %v1533 = vadd.f32 %v1304, %v1532
    %v1534 = vpop.f32.mrf.mxu0
    %v1535 = vpop.f32.mrf.mxu0
    %v1536 = vpop.f32.mrf.mxu0
    %1537 = vdwg.mxu0
    %1538 = vmatprep.subr.bf16.mxu0 0
    %1539 = vmatpush1.bf16.msra.mxu0 %v1457
    %1540 = vmatprep.subr.bf16.mxu0 0
    %1541 = vmatpush1.bf16.msra.mxu0 %v1456
    %1542 = vmatprep.subr.bf16.mxu0 0
    %1543 = vmatpush1.bf16.msra.mxu0 %v1455
    %1544 = vmatprep.subr.bf16.mxu0 0
    %1545 = vmatpush1.bf16.msra.mxu0 %v1454
    %1546 = vmatprep.subr.bf16.mxu0 0
    %1547 = vmatpush1.bf16.msra.mxu0 %v1453
    %1548 = vmatprep.subr.bf16.mxu0 0
    %1549 = vmatpush1.bf16.msra.mxu0 %v1452
    %1550 = vmatprep.subr.bf16.mxu0 0
    %1551 = vmatpush1.bf16.msra.mxu0 %v1451
    %1552 = vmatprep.subr.bf16.mxu0 0
    %1553 = vmatpush1.bf16.msra.mxu0 %v1450
    %1554 = vmatprep.subr.bf16.mxu0 0
    %1555 = vmatpush2.bf16.msra.mxu0 %v1465
    %1556 = vmatprep.subr.bf16.mxu0 0
    %1557 = vmatpush2.bf16.msra.mxu0 %v1464
    %1558 = vmatprep.subr.bf16.mxu0 0
    %1559 = vmatpush2.bf16.msra.mxu0 %v1463
    %1560 = vmatprep.subr.bf16.mxu0 0
    %1561 = vmatpush2.bf16.msra.mxu0 %v1462
    %1562 = vmatprep.subr.bf16.mxu0 0
    %1563 = vmatpush2.bf16.msra.mxu0 %v1461
    %1564 = vmatprep.subr.bf16.mxu0 0
    %1565 = vmatpush2.bf16.msra.mxu0 %v1460
    %1566 = vmatprep.subr.bf16.mxu0 0
    %1567 = vmatpush2.bf16.msra.mxu0 %v1459
    %1568 = vmatprep.subr.bf16.mxu0 0
    %1569 = vmatpush2.bf16.msra.mxu0 %v1458
    %1570 = vmatprep.mubr.bf16.mxu0 %v1234
    %1571 = vmatmul.mubr.bf16.gmra.mxu0 %v1233
    %v1572 = vpop.f32.mrf.mxu0
    %v1573 = vadd.f32 %v1533, %v1572
    %v1574 = vpop.f32.mrf.mxu0
    %v1575 = vpop.f32.mrf.mxu0
    %v1576 = vpop.f32.mrf.mxu0
    %1577 = vdwg.mxu0
    %v1578 = vpack.c.bf16 %v1573, %v1573
    %v1579 = vld [vmem:[#allocation11] sm:$0xf]
    %v1580 = vld [vmem:[#allocation11 + $0x4] sm:$0xf]
    %v1581 = vld [vmem:[#allocation11 + $0x8] sm:$0xf]
    %v1582 = vld [vmem:[#allocation11 + $0xc] sm:$0xf]
    %v1583 = vld [vmem:[#allocation11 + $0x10] sm:$0xf]
    %v1584 = vld [vmem:[#allocation11 + $0x14] sm:$0xf]
    %v1585 = vld [vmem:[#allocation11 + $0x18] sm:$0xf]
    %v1586 = vld [vmem:[#allocation11 + $0x1c] sm:$0xf]
    %v1587 = vld [vmem:[#allocation11 + $0x20] sm:$0xf]
    %v1588 = vld [vmem:[#allocation11 + $0x24] sm:$0xf]
    %v1589 = vld [vmem:[#allocation11 + $0x28] sm:$0xf]
    %v1590 = vld [vmem:[#allocation11 + $0x2c] sm:$0xf]
    %v1591 = vld [vmem:[#allocation11 + $0x30] sm:$0xf]
    %v1592 = vld [vmem:[#allocation11 + $0x34] sm:$0xf]
    %v1593 = vld [vmem:[#allocation11 + $0x38] sm:$0xf]
    %v1594 = vld [vmem:[#allocation11 + $0x3c] sm:$0xf]
    %v1595 = vld [vmem:[%s8] sm:$0x1]
    %v1597 = vlaneseq
    %v1598 = vshrl.u32 %v1597, 7
    %v1599 = vsub.s32 0, %v1598
    %v1600 = vrot.slane %v1595, %v1599
    %v1618 = vunpack.c.l.b16 %v1579
    %v1619 = vunpack.c.l.b16 %v1580
    %v1620 = vunpack.c.l.b16 %v1581
    %v1621 = vunpack.c.l.b16 %v1582
    %v1622 = vunpack.c.l.b16 %v1583
    %v1623 = vunpack.c.l.b16 %v1584
    %v1624 = vunpack.c.l.b16 %v1585
    %v1625 = vunpack.c.l.b16 %v1586
    %v1626 = vunpack.c.l.b16 %v1587
    %v1627 = vunpack.c.l.b16 %v1588
    %v1628 = vunpack.c.l.b16 %v1589
    %v1629 = vunpack.c.l.b16 %v1590
    %v1630 = vunpack.c.l.b16 %v1591
    %v1631 = vunpack.c.l.b16 %v1592
    %v1632 = vunpack.c.l.b16 %v1593
    %v1633 = vunpack.c.l.b16 %v1594
    %v1634 = vpack.c.b16 %v1619, %v1618
    %v1635 = vpack.c.b16 %v1621, %v1620
    %v1636 = vpack.c.b16 %v1623, %v1622
    %v1637 = vpack.c.b16 %v1625, %v1624
    %v1638 = vpack.c.b16 %v1627, %v1626
    %v1639 = vpack.c.b16 %v1629, %v1628
    %v1640 = vpack.c.b16 %v1631, %v1630
    %v1641 = vpack.c.b16 %v1633, %v1632
    %1650 = vmatprep.subr.bf16.mxu0 0
    %1651 = vmatpush1.bf16.msra.mxu0 %v1641
    %1652 = vmatprep.subr.bf16.mxu0 0
    %1653 = vmatpush1.bf16.msra.mxu0 %v1640
    %1654 = vmatprep.subr.bf16.mxu0 0
    %1655 = vmatpush1.bf16.msra.mxu0 %v1639
    %1656 = vmatprep.subr.bf16.mxu0 0
    %1657 = vmatpush1.bf16.msra.mxu0 %v1638
    %1658 = vmatprep.subr.bf16.mxu0 0
    %1659 = vmatpush1.bf16.msra.mxu0 %v1637
    %1660 = vmatprep.subr.bf16.mxu0 0
    %1661 = vmatpush1.bf16.msra.mxu0 %v1636
    %1662 = vmatprep.subr.bf16.mxu0 0
    %1663 = vmatpush1.bf16.msra.mxu0 %v1635
    %1664 = vmatprep.subr.bf16.mxu0 0
    %1665 = vmatpush1.bf16.msra.mxu0 %v1634
    %1666 = vmatprep.subr.bf16.mxu0 0
    %1667 = vmatpush2.bf16.msra.mxu0 0
    %1668 = vmatprep.subr.bf16.mxu0 0
    %1669 = vmatpush2.bf16.msra.mxu0 0
    %1670 = vmatprep.subr.bf16.mxu0 0
    %1671 = vmatpush2.bf16.msra.mxu0 0
    %1672 = vmatprep.subr.bf16.mxu0 0
    %1673 = vmatpush2.bf16.msra.mxu0 0
    %1674 = vmatprep.subr.bf16.mxu0 0
    %1675 = vmatpush2.bf16.msra.mxu0 0
    %1676 = vmatprep.subr.bf16.mxu0 0
    %1677 = vmatpush2.bf16.msra.mxu0 0
    %1678 = vmatprep.subr.bf16.mxu0 0
    %1679 = vmatpush2.bf16.msra.mxu0 0
    %1680 = vmatprep.subr.bf16.mxu0 0
    %1681 = vmatpush2.bf16.msra.mxu0 0
    %1682 = vmatprep.mubr.bf16.mxu0 0
    %1683 = vmatmul.mubr.bf16.gmra.mxu0 %v1578
    %v1684 = vpop.f32.mrf.mxu0
    %v1685 = vadd.f32 %v1600, %v1684
    %v1686 = vpop.f32.mrf.mxu0
    %v1687 = vpop.f32.mrf.mxu0
    %v1688 = vpop.f32.mrf.mxu0
    %1689 = vdwg.mxu0
    %v1690 = vxor.u32 %v1685, 2147483648
    %v1691 = vmul.f32 %v1690, 1.442695
    %v1692 = vpow.pop %v1691
    %v1693 = vadd.f32 %v1692, 1.0
    %v1694 = vrcp.pop %v1693
    %v1695 = vmul.f32 1.0, %v1694
    %1696 = vst [vmem:[#allocation13] sm:$0xff] %v1695
    // Predicated region
    $region62: #{tpu_custom_call.1} parent=1 // pred_check
      _
    $region63: #{tpu_custom_call.1} parent=1 // pred_check_branch
      %1698 = sbr.rel (0) target = $region65
    $region64: #{tpu_custom_call.1} parent=1 // pred_region
      %s1700 = ssub.s32 128, 128
      %1701 = vsyncadd [#allocation4], %s1700
      %s1703 = sshll.u32 [#allocation13], 4
      %s1704 = int_to_ptr.vmem [resolvable:$true] %s1703
      %1706 = dma.vmem_to_hbm [thread:$0]  %s1704, 128, %s9, [#allocation4]
    $region65: #{tpu_custom_call.1} parent=1 // pred_fallthru
      _
    // Predicated region
    $region66: #{tpu_custom_call.1} parent=1 // pred_check
      _
    $region67: #{tpu_custom_call.1} parent=1 // pred_check_branch
      %1708 = sbr.rel (0) target = $region69
    $region68: #{tpu_custom_call.1} parent=1 // pred_region
      %1709 = dma.done [#allocation4], 128
    $region69: #{tpu_custom_call.1} parent=1 // pred_fallthru
      _
    %1710 = vsyncpa [#allocation3], 1
    %1711 = vsyncpa [#allocation6], 1
    %1712 = vsyncpa [#allocation9], 1
    %1713 = vsyncpa [#allocation12], 1
    %1714 = vsyncpa [#allocation4], 1

</llo_original>
